<compile_context>
chip_gen: v7x
topology: tpu7x:2x2x1
jax: 0.10.0
libtpu: 0.0.40
codegen_flags: <defaults>
</compile_context>

<pallas_src>
import functools
import math

import jax
import jax.numpy as jnp
from jax import lax
from jax.experimental import pallas as pl
from jax.experimental.pallas import tpu as pltpu

# Matmul operand dtype.  f32 is numerically safe on every chip; on v6e/v7x set
# to jnp.bfloat16 for MXU-native throughput (f32 accumulation is kept).
_MM_DTYPE = jnp.float32


# --------------------------------------------------------------------------
# Kernel 1: fused Conv1d(k=3, stride=1, pad=1) + ReLU + roi_align matmuls.
# Grid over batch; the conv runs once (all batches folded into one matmul).
# --------------------------------------------------------------------------
def _conv_roi_kernel(xs_ref, wc_ref, bc_ref, s_ref, o_ref, y_ref, *, T, roi_size):
    b = pl.program_id(0)

    # Conv for the whole batch as a single (B*T, 3*C_in) x (3*C_in, C_out)
    # MXU matmul; the result stays resident in VMEM scratch for later steps.
    @pl.when(b == 0)
    def _():
        y = jnp.dot(xs_ref[...].astype(_MM_DTYPE), wc_ref[...].astype(_MM_DTYPE),
                    preferred_element_type=jnp.float32) + bc_ref[...]
        y_ref[...] = jnp.maximum(y, 0.0)                    # ReLU, f32

    row0 = pl.multiple_of(b * T, 8)
    y_b = y_ref[pl.ds(row0, T), :].astype(_MM_DTYPE)        # (T, C_out), this batch

    # roi_align gather/reduce: one matmul per roi bin r against the per-batch
    # sampling matrix; lane-concatenation emits the per-proposal lane-dense
    # (A, roi_size*C_out) slab directly (column order r*C_out + c).
    cols = []
    for r in range(roi_size):
        s_r = s_ref[r].astype(_MM_DTYPE)                    # (A, T)
        cols.append(jnp.dot(s_r, y_b, preferred_element_type=jnp.float32))
    o_ref[...] = jnp.concatenate(cols, axis=1).astype(o_ref.dtype)


def conv_roi(x, wc, bc, s_bt):
    """x: (B, C_in, T); wc: (3*C_in, C_out); bc: (1, C_out);
    s_bt: (B, R, A, T) roi_align sampling weights -> (B, A, R*C_out) slab."""
    B, C_in, T = x.shape
    C_out = wc.shape[1]
    _, R, A, _ = s_bt.shape

    # Stack the 3 conv taps along K host-side (keeps the conv a single matmul).
    # TODO(synk): build taps in-kernel from the raw (C_in, T) block to drop the
    # 3x HBM footprint of xs (minor vs. s_bt traffic at real BMN scale).
    x_pad = jnp.pad(x, ((0, 0), (0, 0), (1, 1)))
    taps = jnp.concatenate([x_pad[:, :, 0:T], x_pad[:, :, 1:T + 1],
                            x_pad[:, :, 2:T + 2]], axis=1)      # (B, 3*C_in, T)
    xs = taps.transpose(0, 2, 1).reshape(B * T, 3 * C_in)       # rows = (b, t)

    kernel = functools.partial(_conv_roi_kernel, T=T, roi_size=R)
    return pl.pallas_call(
        kernel,
        out_shape=jax.ShapeDtypeStruct((B, A, R * C_out), x.dtype),
        grid=(B,),
        in_specs=[
            pl.BlockSpec((B * T, 3 * C_in), lambda b: (0, 0)),
            pl.BlockSpec((3 * C_in, C_out), lambda b: (0, 0)),
            pl.BlockSpec((1, C_out), lambda b: (0, 0)),
            pl.BlockSpec((None, R, A, T), lambda b: (b, 0, 0, 0)),
        ],
        out_specs=pl.BlockSpec((None, A, R * C_out), lambda b: (b, 0, 0)),
        scratch_shapes=[pltpu.VMEM((B * T, C_out), jnp.float32)],
        # The batch axis carries the conv scratch (written at b==0), so it must
        # stay "arbitrary" (sequential).
        # TODO(synk): on v7x, tile the A axis and use pltpu.CORE_PARALLEL on it
        # to split the roi matmuls across both TensorCores.
        compiler_params=pltpu.CompilerParams(
            dimension_semantics=("arbitrary",)),
    )(xs, wc, bc, s_bt)


# --------------------------------------------------------------------------
# Kernel 2: all six FC heads fused into 6 wide matmuls, row-tiled over N.
# --------------------------------------------------------------------------
def _heads_kernel(slab_ref, wrd_ref, brd_ref, wse_ref, bse_ref,
                  w2_ref, b2_ref, w3_ref, b3_ref, w4_ref, b4_ref,
                  w5_ref, b5_ref, o_ref, *, q_cols, rc_cols):
    def mm(a, w_ref, b_ref):
        return jnp.dot(a.astype(_MM_DTYPE), w_ref[...].astype(_MM_DTYPE),
                       preferred_element_type=jnp.float32) + b_ref[...]

    slab = slab_ref[...]                                         # (tile_n, R*C_out)
    h = jnp.maximum(mm(slab, wrd_ref, brd_ref), 0.0)             # shared trunk
    x_se = jnp.concatenate([slab[:, :q_cols], slab[:, rc_cols - q_cols:]], axis=1)
    se = jnp.maximum(mm(x_se, wse_ref, bse_ref), 0.0)            # reg_s | reg_e L1
    a = jnp.concatenate([h, se], axis=1)                         # (tile_n, 3*mid)
    a = jnp.maximum(mm(a, w2_ref, b2_ref), 0.0)                  # 5 heads fused
    a = jnp.maximum(mm(a, w3_ref, b3_ref), 0.0)
    a = jnp.maximum(mm(a, w4_ref, b4_ref), 0.0)
    pre = mm(a, w5_ref, b5_ref)                                  # (tile_n, 8)

    col = lax.broadcasted_iota(jnp.int32, pre.shape, 1)
    sig_cols = (col < 2) | (col >= 6)                            # iou / cls_se
    cw_cols = (col >= 4) & (col < 6)                             # reg_cw / 2
    out = jnp.where(sig_cols, jax.nn.sigmoid(pre),
                    jnp.where(cw_cols, 0.5 * pre, pre))
    o_ref[...] = out.astype(o_ref.dtype)


def _choose_tile_n(N, max_tile=512):
    if N <= max_tile:
        return N
    for t in range(max_tile - max_tile % 8, 7, -8):
        if N % t == 0:
            return t
    return N   # TODO(synk): pad N to a tileable size for ragged proposal counts


def fused_heads(slab, hp, *, max_tile_n=512):
    N, RC = slab.shape
    q_cols = hp["w_se1"].shape[0] // 2
    tn = _choose_tile_n(N, max_tile_n)
    names = ["w_rd", "b_rd", "w_se1", "b_se1", "w2", "b2",
             "w3", "b3", "w4", "b4", "w5", "b5"]
    weights = [hp[n] for n in names]
    w_specs = [pl.BlockSpec(w.shape, lambda i: (0, 0)) for w in weights]

    kernel = functools.partial(_heads_kernel, q_cols=q_cols, rc_cols=RC)
    return pl.pallas_call(
        kernel,
        out_shape=jax.ShapeDtypeStruct((N, 8), slab.dtype),
        grid=(N // tn,),
        in_specs=[pl.BlockSpec((tn, RC), lambda i: (i, 0))] + w_specs,
        out_specs=pl.BlockSpec((tn, 8), lambda i: (i, 0)),
        # TODO(synk): pltpu.CORE_PARALLEL here on v7x (2 TensorCores).
        compiler_params=pltpu.CompilerParams(
            dimension_semantics=("parallel",)),
    )(slab, *weights)


# --------------------------------------------------------------------------
# roi_align sampling-weight construction (one-time eager glue, outside jit).
# Faithful to torchvision.ops.roi_align(aligned=False, sampling_ratio=-1,
# spatial_scale=1) on a (C, T, 1) pseudo image with boxes (0, s, 1, e).
# --------------------------------------------------------------------------
def get_samples(anchors_init, tscale, extend_ratio):
    """Replicates pem_module._get_samples (extended start/end, n = b*A + a)."""
    anchors = anchors_init * tscale
    s = anchors[..., 0].reshape(-1)
    e = anchors[..., 1].reshape(-1)
    length = e - s
    return s - extend_ratio * length, e + extend_ratio * length


def roi_sampling_matrix(starts, ends, tscale, roi_size, max_grid):
    N = starts.shape[0]
    roi_h = jnp.maximum(ends - starts, 1.0)
    bin_h = roi_h / roi_size
    grid_h = jnp.ceil(roi_h / roi_size).astype(jnp.int32)        # adaptive ratio
    count = jnp.maximum(grid_h, 1).astype(jnp.float32)           # grid_w == 1

    ph = jnp.arange(roi_size, dtype=jnp.float32)
    iy = jnp.arange(max_grid, dtype=jnp.float32)
    y = (starts[:, None, None]
         + ph[None, :, None] * bin_h[:, None, None]
         + (iy[None, None, :] + 0.5) * bin_h[:, None, None] / count[:, None, None])

    valid = jnp.arange(max_grid)[None, None, :] < grid_h[:, None, None]
    in_range = (y >= -1.0) & (y <= float(tscale))
    yc = jnp.maximum(y, 0.0)
    y_low0 = jnp.floor(yc)
    top = y_low0 >= float(tscale - 1)
    y_low = jnp.where(top, float(tscale - 1), y_low0)
    y_high = jnp.where(top, float(tscale - 1), y_low0 + 1.0)
    y_used = jnp.where(top, y_low, yc)
    ly = y_used - y_low
    hy = 1.0 - ly
    w = jnp.where(valid & in_range, 1.0, 0.0) / count[:, None, None]

    yl = y_low.astype(jnp.int32)
    yh = y_high.astype(jnp.int32)
    n_i = jnp.arange(N)[:, None, None]
    r_i = jnp.arange(roi_size)[None, :, None]
    S = jnp.zeros((N, roi_size, tscale), jnp.float32)
    S = S.at[n_i, r_i, yl].add(w * hy)
    S = S.at[n_i, r_i, yh].add(w * ly)
    return S                                                     # (N, R, T)


def build_sampling(anchors_init, tscale, roi_size, extend_ratio):
    """One-time (eager, out-of-jit) sampling weights, laid out (B, R, A, T)."""
    B, A, _ = anchors_init.shape
    s_ext, e_ext = get_samples(anchors_init, tscale, extend_ratio)
    roi_h = jnp.maximum(e_ext - s_ext, 1.0)
    max_grid = max(1, int(math.ceil(float(jnp.max(roi_h)) / roi_size)))
    S = roi_sampling_matrix(s_ext, e_ext, tscale, roi_size, max_grid)
    return S.reshape(B, A, roi_size, tscale).transpose(0, 2, 1, 3)


# --------------------------------------------------------------------------
# Parameter init (torch layout) + one-time host-side packing.
# --------------------------------------------------------------------------
def _linear(key, d_in, d_out):
    kw, kb = jax.random.split(key)
    W = jax.random.normal(kw, (d_in, d_out), jnp.float32) / math.sqrt(d_in)
    b = 0.01 * jax.random.normal(kb, (1, d_out), jnp.float32)
    return (W, b)


def _mlp_params(key, dims):
    keys = jax.random.split(key, len(dims) - 1)
    return [_linear(k, dims[i], dims[i + 1]) for i, k in enumerate(keys)]


def init_params(key, in_dim, mid_dim, fc_dim, roi_size):
    half = in_dim // 2
    q_in = half * roi_size // 4
    ks = jax.random.split(key, 8)
    conv_w = jax.random.normal(ks[0], (half, in_dim, 3), jnp.float32) / math.sqrt(in_dim * 3)
    conv_b = 0.01 * jax.random.normal(ks[1], (half,), jnp.float32)
    return {
        "conv_w": conv_w, "conv_b": conv_b,
        "reduce_dim_ext": _mlp_params(ks[2], [half * roi_size, mid_dim]),
        "iou_fc": _mlp_params(ks[3], [mid_dim, fc_dim, fc_dim, fc_dim, 2]),
        "cls_se_fc": _mlp_params(ks[4], [mid_dim, fc_dim, fc_dim, fc_dim, 2]),
        "reg_cw_fc": _mlp_params(ks[5], [mid_dim, fc_dim, fc_dim, fc_dim, 2]),
        "reg_s_fc": _mlp_params(ks[6], [q_in, mid_dim, fc_dim, fc_dim, fc_dim, 1]),
        "reg_e_fc": _mlp_params(ks[7], [q_in, mid_dim, fc_dim, fc_dim, fc_dim, 1]),
    }


def _rows_cr_to_rc(W, C, R):
    """Permute rows from the torch (c*R + r) flatten order to the kernel's
    lane-dense slab order (r*C + c)."""
    return W.reshape(C, R, W.shape[1]).transpose(1, 0, 2).reshape(R * C, W.shape[1])


def _block_diag(blocks):
    rows = sum(b.shape[0] for b in blocks)
    cols = sum(b.shape[1] for b in blocks)
    out = jnp.zeros((rows, cols), blocks[0].dtype)
    r = c = 0
    for b in blocks:
        out = out.at[r:r + b.shape[0], c:c + b.shape[1]].set(b)
        r += b.shape[0]
        c += b.shape[1]
    return out


def pack_params(p, roi_size, mid_dim, fc_dim):
    """One-time packing: conv taps stacked along K; FC weights row-permuted to
    the slab layout and block-diagonal-fused into 6 wide layers."""
    conv_w, conv_b = p["conv_w"], p["conv_b"]
    C_out, C_in, _ = conv_w.shape
    q = roi_size // 4
    mid, fc = mid_dim, fc_dim

    wc = conv_w.transpose(2, 1, 0).reshape(3 * C_in, C_out)     # rows = (tap, c_in)
    bc = conv_b.reshape(1, C_out)

    (w_rd, b_rd), = p["reduce_dim_ext"]
    w_rd = _rows_cr_to_rc(w_rd, C_out, roi_size)

    iou, cls, cw = p["iou_fc"], p["cls_se_fc"], p["reg_cw_fc"]
    s_, e_ = p["reg_s_fc"], p["reg_e_fc"]

    w_se1 = _block_diag([_rows_cr_to_rc(s_[0][0], C_out, q),
                         _rows_cr_to_rc(e_[0][0], C_out, q)])
    b_se1 = jnp.concatenate([s_[0][1], e_[0][1]], axis=1)

    w2 = jnp.zeros((3 * mid, 5 * fc), jnp.float32)
    w2 = w2.at[:mid, 0 * fc:1 * fc].set(iou[0][0])
    w2 = w2.at[:mid, 1 * fc:2 * fc].set(cls[0][0])
    w2 = w2.at[:mid, 2 * fc:3 * fc].set(cw[0][0])
    w2 = w2.at[mid:2 * mid, 3 * fc:4 * fc].set(s_[1][0])
    w2 = w2.at[2 * mid:3 * mid, 4 * fc:5 * fc].set(e_[1][0])
    b2 = jnp.concatenate([iou[0][1], cls[0][1], cw[0][1], s_[1][1], e_[1][1]], axis=1)

    w3 = _block_diag([iou[1][0], cls[1][0], cw[1][0], s_[2][0], e_[2][0]])
    b3 = jnp.concatenate([iou[1][1], cls[1][1], cw[1][1], s_[2][1], e_[2][1]], axis=1)
    w4 = _block_diag([iou[2][0], cls[2][0], cw[2][0], s_[3][0], e_[3][0]])
    b4 = jnp.concatenate([iou[2][1], cls[2][1], cw[2][1], s_[3][1], e_[3][1]], axis=1)

    # Final layer: each head's outputs land in its column slot of the (N, 8)
    # slab: [0:2]=iou [2]=reg_s [3]=reg_e [4:6]=reg_cw [6:8]=cls_se.
    w5 = jnp.zeros((5 * fc, 8), jnp.float32)
    w5 = w5.at[0 * fc:1 * fc, 0:2].set(iou[3][0])
    w5 = w5.at[1 * fc:2 * fc, 6:8].set(cls[3][0])
    w5 = w5.at[2 * fc:3 * fc, 4:6].set(cw[3][0])
    w5 = w5.at[3 * fc:4 * fc, 2:3].set(s_[4][0])
    w5 = w5.at[4 * fc:5 * fc, 3:4].set(e_[4][0])
    b5 = jnp.zeros((1, 8), jnp.float32)
    b5 = b5.at[:, 0:2].set(iou[3][1]).at[:, 6:8].set(cls[3][1]).at[:, 4:6].set(cw[3][1])
    b5 = b5.at[:, 2:3].set(s_[4][1]).at[:, 3:4].set(e_[4][1])

    return {"wc": wc, "bc": bc, "w_rd": w_rd, "b_rd": b_rd,
            "w_se1": w_se1, "b_se1": b_se1, "w2": w2, "b2": b2,
            "w3": w3, "b3": b3, "w4": w4, "b4": b4, "w5": w5, "b5": b5}


# --------------------------------------------------------------------------
# Full forward pass (2 Pallas kernels + thin XLA glue)
# --------------------------------------------------------------------------
def pem_forward(packed, x, s_bt):
    """packed: pre-packed params; x: (B, C_in, T); s_bt: (B, R, A, T)."""
    B = x.shape[0]
    A = s_bt.shape[2]
    slab3 = conv_roi(x, packed["wc"], packed["bc"], s_bt)       # (B, A, R*C_out)
    slab = slab3.reshape(B * A, slab3.shape[2])                 # free reshape
    out = fused_heads(slab, packed)                             # (N, 8)
    return out[:, 0:2], out[:, 2:8]                             # iou_out, reg_out


# --------------------------------------------------------------------------
if __name__ == "__main__":
    # small shapes consistent with the module
    IN_DIM, MID_DIM, FC_DIM = 32, 64, 32
    ROI_SIZE, TSCALE, EXT = 8, 32, 0.5
    BS, N_ANCHORS = 2, 4

    key = jax.random.PRNGKey(0)
    k_p, k_x, k_s, k_l = jax.random.split(key, 4)

    params = init_params(k_p, IN_DIM, MID_DIM, FC_DIM, ROI_SIZE)
    packed = pack_params(params, ROI_SIZE, MID_DIM, FC_DIM)      # one-time packing

    x = jax.random.normal(k_x, (BS, IN_DIM, TSCALE), jnp.float32)
    starts = jax.random.uniform(k_s, (BS, N_ANCHORS), minval=0.0, maxval=0.55)
    lens = jax.random.uniform(k_l, (BS, N_ANCHORS), minval=0.1, maxval=0.4)
    anchors_init = jnp.stack([starts, starts + lens], axis=-1)   # (BS, A, 2)

    # data-dependent roi_align weights hoisted out of the per-step jit
    s_bt = build_sampling(anchors_init, TSCALE, ROI_SIZE, EXT)   # (B, R, A, T)

    fwd = jax.jit(pem_forward)
    iou_out, reg_out = fwd(packed, x, s_bt)
    jax.block_until_ready((iou_out, reg_out))

    assert iou_out.shape == (BS * N_ANCHORS, 2)
    assert reg_out.shape == (BS * N_ANCHORS, 6)
    assert bool(jnp.all(jnp.isfinite(iou_out))) and bool(jnp.all(jnp.isfinite(reg_out)))
    print("KERNEL_OK")
</pallas_src>

<mosaic_0001>
module attributes {stable_mosaic.version = 11 : i64} {
  func.func @_conv_roi_kernel(%arg0: i32, %arg1: memref<64x96xf32, #tpu.memory_space<vmem>>, %arg2: memref<96x16xf32, #tpu.memory_space<vmem>>, %arg3: memref<1x16xf32, #tpu.memory_space<vmem>>, %arg4: memref<1x8x4x32xf32, #tpu.memory_space<vmem>>, %arg5: memref<1x4x128xf32, #tpu.memory_space<vmem>>, %arg6: memref<64x16xf32, #tpu.memory_space<vmem>>) attributes {dimension_semantics = [#tpu.dimension_semantics<arbitrary>], iteration_bounds = array<i64: 2>, scalar_prefetch = 0 : i64, scratch_operands = 1 : i64, tpu.core_type = #tpu.core_type<tc>, window_params = [{pipeline_mode = #tpu.pipeline_mode<synchronous>, transform_indices = @transform_0, window_bounds = array<i64: 64, 96>}, {pipeline_mode = #tpu.pipeline_mode<synchronous>, transform_indices = @transform_1, window_bounds = array<i64: 96, 16>}, {pipeline_mode = #tpu.pipeline_mode<synchronous>, transform_indices = @transform_2, window_bounds = array<i64: 1, 16>}, {transform_indices = @transform_3, window_bounds = array<i64: 1, 8, 4, 32>}, {transform_indices = @transform_4, window_bounds = array<i64: 1, 4, 128>}]} {
    %c0_i32 = arith.constant 0 : i32
    %0 = arith.cmpi eq, %arg0, %c0_i32 : i32
    %1 = arith.extui %0 : i1 to i32
    %c0_i32_0 = arith.constant 0 : i32
    %2 = arith.cmpi ne, %1, %c0_i32_0 : i32
    scf.if %2 {
      %c0_36 = arith.constant 0 : index
      %c0_37 = arith.constant 0 : index
      %35 = vector.load %arg1[%c0_36, %c0_37] : memref<64x96xf32, #tpu.memory_space<vmem>>, vector<64x96xf32>
      %c0_38 = arith.constant 0 : index
      %c0_39 = arith.constant 0 : index
      %36 = vector.load %arg2[%c0_38, %c0_39] : memref<96x16xf32, #tpu.memory_space<vmem>>, vector<96x16xf32>
      %cst_40 = arith.constant dense<0.000000e+00> : vector<64x16xf32>
      %37 = tpu.matmul %35, %36, %cst_40 {dimension_numbers = #tpu.dot_dimension_numbers<[1], [0], [0], [1], [0, 0, 1, 1], [], []>} : vector<64x96xf32>, vector<96x16xf32>, vector<64x16xf32> -> vector<64x16xf32>
      %c0_41 = arith.constant 0 : index
      %c0_42 = arith.constant 0 : index
      %38 = vector.load %arg3[%c0_41, %c0_42] : memref<1x16xf32, #tpu.memory_space<vmem>>, vector<1x16xf32>
      %39 = vector.broadcast %38 : vector<1x16xf32> to vector<64x16xf32>
      %40 = arith.addf %37, %39 : vector<64x16xf32>
      %cst_43 = arith.constant 0.000000e+00 : f32
      %41 = vector.broadcast %cst_43 : f32 to vector<64x16xf32>
      %42 = arith.maximumf %40, %41 : vector<64x16xf32>
      %c0_44 = arith.constant 0 : index
      %c0_45 = arith.constant 0 : index
      %43 = vector.load %arg6[%c0_44, %c0_45] : memref<64x16xf32, #tpu.memory_space<vmem>>, vector<64x16xf32>
      tpu.vector_store %arg6[%c0_44, %c0_45], %42 {strides = array<i32>} : memref<64x16xf32, #tpu.memory_space<vmem>>, vector<64x16xf32>,
    } else {
    }
    %c32_i32 = arith.constant 32 : i32
    %3 = arith.muli %arg0, %c32_i32 : i32
    %4 = tpu.assume_multiple %3, 8 : i32
    %5 = arith.index_cast %4 : i32 to index
    %c0 = arith.constant 0 : index
    %6 = vector.load %arg6[%5, %c0] : memref<64x16xf32, #tpu.memory_space<vmem>>, vector<32x16xf32>
    %c0_1 = arith.constant 0 : index
    %c0_2 = arith.constant 0 : index
    %c0_3 = arith.constant 0 : index
    %c0_4 = arith.constant 0 : index
    %7 = vector.load %arg4[%c0_1, %c0_2, %c0_3, %c0_4] : memref<1x8x4x32xf32, #tpu.memory_space<vmem>>, vector<1x1x4x32xf32>
    %8 = vector.shape_cast %7 : vector<1x1x4x32xf32> to vector<4x32xf32>
    %cst = arith.constant dense<0.000000e+00> : vector<4x16xf32>
    %9 = tpu.matmul %8, %6, %cst {dimension_numbers = #tpu.dot_dimension_numbers<[1], [0], [0], [1], [0, 0, 1, 1], [], []>} : vector<4x32xf32>, vector<32x16xf32>, vector<4x16xf32> -> vector<4x16xf32>
    %c0_5 = arith.constant 0 : index
    %c1 = arith.constant 1 : index
    %c0_6 = arith.constant 0 : index
    %c0_7 = arith.constant 0 : index
    %10 = vector.load %arg4[%c0_5, %c1, %c0_6, %c0_7] : memref<1x8x4x32xf32, #tpu.memory_space<vmem>>, vector<1x1x4x32xf32>
    %11 = vector.shape_cast %10 : vector<1x1x4x32xf32> to vector<4x32xf32>
    %cst_8 = arith.constant dense<0.000000e+00> : vector<4x16xf32>
    %12 = tpu.matmul %11, %6, %cst_8 {dimension_numbers = #tpu.dot_dimension_numbers<[1], [0], [0], [1], [0, 0, 1, 1], [], []>} : vector<4x32xf32>, vector<32x16xf32>, vector<4x16xf32> -> vector<4x16xf32>
    %c0_9 = arith.constant 0 : index
    %c2 = arith.constant 2 : index
    %c0_10 = arith.constant 0 : index
    %c0_11 = arith.constant 0 : index
    %13 = vector.load %arg4[%c0_9, %c2, %c0_10, %c0_11] : memref<1x8x4x32xf32, #tpu.memory_space<vmem>>, vector<1x1x4x32xf32>
    %14 = vector.shape_cast %13 : vector<1x1x4x32xf32> to vector<4x32xf32>
    %cst_12 = arith.constant dense<0.000000e+00> : vector<4x16xf32>
    %15 = tpu.matmul %14, %6, %cst_12 {dimension_numbers = #tpu.dot_dimension_numbers<[1], [0], [0], [1], [0, 0, 1, 1], [], []>} : vector<4x32xf32>, vector<32x16xf32>, vector<4x16xf32> -> vector<4x16xf32>
    %c0_13 = arith.constant 0 : index
    %c3 = arith.constant 3 : index
    %c0_14 = arith.constant 0 : index
    %c0_15 = arith.constant 0 : index
    %16 = vector.load %arg4[%c0_13, %c3, %c0_14, %c0_15] : memref<1x8x4x32xf32, #tpu.memory_space<vmem>>, vector<1x1x4x32xf32>
    %17 = vector.shape_cast %16 : vector<1x1x4x32xf32> to vector<4x32xf32>
    %cst_16 = arith.constant dense<0.000000e+00> : vector<4x16xf32>
    %18 = tpu.matmul %17, %6, %cst_16 {dimension_numbers = #tpu.dot_dimension_numbers<[1], [0], [0], [1], [0, 0, 1, 1], [], []>} : vector<4x32xf32>, vector<32x16xf32>, vector<4x16xf32> -> vector<4x16xf32>
    %c0_17 = arith.constant 0 : index
    %c4 = arith.constant 4 : index
    %c0_18 = arith.constant 0 : index
    %c0_19 = arith.constant 0 : index
    %19 = vector.load %arg4[%c0_17, %c4, %c0_18, %c0_19] : memref<1x8x4x32xf32, #tpu.memory_space<vmem>>, vector<1x1x4x32xf32>
    %20 = vector.shape_cast %19 : vector<1x1x4x32xf32> to vector<4x32xf32>
    %cst_20 = arith.constant dense<0.000000e+00> : vector<4x16xf32>
    %21 = tpu.matmul %20, %6, %cst_20 {dimension_numbers = #tpu.dot_dimension_numbers<[1], [0], [0], [1], [0, 0, 1, 1], [], []>} : vector<4x32xf32>, vector<32x16xf32>, vector<4x16xf32> -> vector<4x16xf32>
    %c0_21 = arith.constant 0 : index
    %c5 = arith.constant 5 : index
    %c0_22 = arith.constant 0 : index
    %c0_23 = arith.constant 0 : index
    %22 = vector.load %arg4[%c0_21, %c5, %c0_22, %c0_23] : memref<1x8x4x32xf32, #tpu.memory_space<vmem>>, vector<1x1x4x32xf32>
    %23 = vector.shape_cast %22 : vector<1x1x4x32xf32> to vector<4x32xf32>
    %cst_24 = arith.constant dense<0.000000e+00> : vector<4x16xf32>
    %24 = tpu.matmul %23, %6, %cst_24 {dimension_numbers = #tpu.dot_dimension_numbers<[1], [0], [0], [1], [0, 0, 1, 1], [], []>} : vector<4x32xf32>, vector<32x16xf32>, vector<4x16xf32> -> vector<4x16xf32>
    %c0_25 = arith.constant 0 : index
    %c6 = arith.constant 6 : index
    %c0_26 = arith.constant 0 : index
    %c0_27 = arith.constant 0 : index
    %25 = vector.load %arg4[%c0_25, %c6, %c0_26, %c0_27] : memref<1x8x4x32xf32, #tpu.memory_space<vmem>>, vector<1x1x4x32xf32>
    %26 = vector.shape_cast %25 : vector<1x1x4x32xf32> to vector<4x32xf32>
    %cst_28 = arith.constant dense<0.000000e+00> : vector<4x16xf32>
    %27 = tpu.matmul %26, %6, %cst_28 {dimension_numbers = #tpu.dot_dimension_numbers<[1], [0], [0], [1], [0, 0, 1, 1], [], []>} : vector<4x32xf32>, vector<32x16xf32>, vector<4x16xf32> -> vector<4x16xf32>
    %c0_29 = arith.constant 0 : index
    %c7 = arith.constant 7 : index
    %c0_30 = arith.constant 0 : index
    %c0_31 = arith.constant 0 : index
    %28 = vector.load %arg4[%c0_29, %c7, %c0_30, %c0_31] : memref<1x8x4x32xf32, #tpu.memory_space<vmem>>, vector<1x1x4x32xf32>
    %29 = vector.shape_cast %28 : vector<1x1x4x32xf32> to vector<4x32xf32>
    %cst_32 = arith.constant dense<0.000000e+00> : vector<4x16xf32>
    %30 = tpu.matmul %29, %6, %cst_32 {dimension_numbers = #tpu.dot_dimension_numbers<[1], [0], [0], [1], [0, 0, 1, 1], [], []>} : vector<4x32xf32>, vector<32x16xf32>, vector<4x16xf32> -> vector<4x16xf32>
    %31 = tpu.concatenate %9, %12, %15, %18, %21, %24, %27, %30 in 1 : vector<4x16xf32>, vector<4x16xf32>, vector<4x16xf32>, vector<4x16xf32>, vector<4x16xf32>, vector<4x16xf32>, vector<4x16xf32>, vector<4x16xf32> -> vector<4x128xf32>
    %c0_33 = arith.constant 0 : index
    %c0_34 = arith.constant 0 : index
    %c0_35 = arith.constant 0 : index
    %32 = vector.load %arg5[%c0_33, %c0_34, %c0_35] : memref<1x4x128xf32, #tpu.memory_space<vmem>>, vector<1x4x128xf32>
    %33 = vector.shape_cast %32 : vector<1x4x128xf32> to vector<4x128xf32>
    %34 = vector.shape_cast %31 : vector<4x128xf32> to vector<1x4x128xf32>
    tpu.vector_store %arg5[%c0_33, %c0_34, %c0_35], %34 {strides = array<i32>} : memref<1x4x128xf32, #tpu.memory_space<vmem>>, vector<1x4x128xf32>,
    return
  }
  func.func @transform_0(%arg0: i32) -> (i32, i32) {
    %c0_i32 = arith.constant 0 : i32
    %c0_i32_0 = arith.constant 0 : i32
    %c0_i32_1 = arith.constant 0 : i32
    return %c0_i32, %c0_i32_0 : i32, i32
  }
  func.func @transform_1(%arg0: i32) -> (i32, i32) {
    %c0_i32 = arith.constant 0 : i32
    %c0_i32_0 = arith.constant 0 : i32
    %c0_i32_1 = arith.constant 0 : i32
    return %c0_i32, %c0_i32_0 : i32, i32
  }
  func.func @transform_2(%arg0: i32) -> (i32, i32) {
    %c0_i32 = arith.constant 0 : i32
    %c0_i32_0 = arith.constant 0 : i32
    %c0_i32_1 = arith.constant 0 : i32
    return %c0_i32, %c0_i32_0 : i32, i32
  }
  func.func @transform_3(%arg0: i32) -> (i32, i32, i32, i32) {
    %c0_i32 = arith.constant 0 : i32
    %c0_i32_0 = arith.constant 0 : i32
    %c0_i32_1 = arith.constant 0 : i32
    %c0_i32_2 = arith.constant 0 : i32
    return %arg0, %c0_i32, %c0_i32_0, %c0_i32_1 : i32, i32, i32, i32
  }
  func.func @transform_4(%arg0: i32) -> (i32, i32, i32) {
    %c0_i32 = arith.constant 0 : i32
    %c0_i32_0 = arith.constant 0 : i32
    %c0_i32_1 = arith.constant 0 : i32
    return %arg0, %c0_i32, %c0_i32_0 : i32, i32, i32
  }
}

module attributes {stable_mosaic.version = 11 : i64} {
  func.func @_heads_kernel(%arg0: i32, %arg1: memref<8x128xf32, #tpu.memory_space<vmem>>, %arg2: memref<128x64xf32, #tpu.memory_space<vmem>>, %arg3: memref<1x64xf32, #tpu.memory_space<vmem>>, %arg4: memref<64x128xf32, #tpu.memory_space<vmem>>, %arg5: memref<1x128xf32, #tpu.memory_space<vmem>>, %arg6: memref<192x160xf32, #tpu.memory_space<vmem>>, %arg7: memref<1x160xf32, #tpu.memory_space<vmem>>, %arg8: memref<160x160xf32, #tpu.memory_space<vmem>>, %arg9: memref<1x160xf32, #tpu.memory_space<vmem>>, %arg10: memref<160x160xf32, #tpu.memory_space<vmem>>, %arg11: memref<1x160xf32, #tpu.memory_space<vmem>>, %arg12: memref<160x8xf32, #tpu.memory_space<vmem>>, %arg13: memref<1x8xf32, #tpu.memory_space<vmem>>, %arg14: memref<8x8xf32, #tpu.memory_space<vmem>>) attributes {dimension_semantics = [#tpu.dimension_semantics<parallel>], iteration_bounds = array<i64: 1>, scalar_prefetch = 0 : i64, scratch_operands = 0 : i64, tpu.core_type = #tpu.core_type<tc>, window_params = [{transform_indices = @transform_0, window_bounds = array<i64: 8, 128>}, {pipeline_mode = #tpu.pipeline_mode<synchronous>, transform_indices = @transform_1, window_bounds = array<i64: 128, 64>}, {pipeline_mode = #tpu.pipeline_mode<synchronous>, transform_indices = @transform_2, window_bounds = array<i64: 1, 64>}, {pipeline_mode = #tpu.pipeline_mode<synchronous>, transform_indices = @transform_3, window_bounds = array<i64: 64, 128>}, {pipeline_mode = #tpu.pipeline_mode<synchronous>, transform_indices = @transform_4, window_bounds = array<i64: 1, 128>}, {pipeline_mode = #tpu.pipeline_mode<synchronous>, transform_indices = @transform_5, window_bounds = array<i64: 192, 160>}, {pipeline_mode = #tpu.pipeline_mode<synchronous>, transform_indices = @transform_6, window_bounds = array<i64: 1, 160>}, {pipeline_mode = #tpu.pipeline_mode<synchronous>, transform_indices = @transform_7, window_bounds = array<i64: 160, 160>}, {pipeline_mode = #tpu.pipeline_mode<synchronous>, transform_indices = @transform_8, window_bounds = array<i64: 1, 160>}, {pipeline_mode = #tpu.pipeline_mode<synchronous>, transform_indices = @transform_9, window_bounds = array<i64: 160, 160>}, {pipeline_mode = #tpu.pipeline_mode<synchronous>, transform_indices = @transform_10, window_bounds = array<i64: 1, 160>}, {pipeline_mode = #tpu.pipeline_mode<synchronous>, transform_indices = @transform_11, window_bounds = array<i64: 160, 8>}, {pipeline_mode = #tpu.pipeline_mode<synchronous>, transform_indices = @transform_12, window_bounds = array<i64: 1, 8>}, {transform_indices = @transform_13, window_bounds = array<i64: 8, 8>}]} {
    %c0 = arith.constant 0 : index
    %c0_0 = arith.constant 0 : index
    %0 = vector.load %arg1[%c0, %c0_0] : memref<8x128xf32, #tpu.memory_space<vmem>>, vector<8x128xf32>
    %c0_1 = arith.constant 0 : index
    %c0_2 = arith.constant 0 : index
    %1 = vector.load %arg2[%c0_1, %c0_2] : memref<128x64xf32, #tpu.memory_space<vmem>>, vector<128x64xf32>
    %cst = arith.constant dense<0.000000e+00> : vector<8x64xf32>
    %2 = tpu.matmul %0, %1, %cst {dimension_numbers = #tpu.dot_dimension_numbers<[1], [0], [0], [1], [0, 0, 1, 1], [], []>} : vector<8x128xf32>, vector<128x64xf32>, vector<8x64xf32> -> vector<8x64xf32>
    %c0_3 = arith.constant 0 : index
    %c0_4 = arith.constant 0 : index
    %3 = vector.load %arg3[%c0_3, %c0_4] : memref<1x64xf32, #tpu.memory_space<vmem>>, vector<1x64xf32>
    %4 = vector.broadcast %3 : vector<1x64xf32> to vector<8x64xf32>
    %5 = arith.addf %2, %4 : vector<8x64xf32>
    %cst_5 = arith.constant 0.000000e+00 : f32
    %6 = vector.broadcast %cst_5 : f32 to vector<8x64xf32>
    %7 = arith.maximumf %5, %6 : vector<8x64xf32>
    %8 = vector.extract_strided_slice %0 {offsets = [0, 0], sizes = [8, 32], strides = [1, 1]} : vector<8x128xf32> to vector<8x32xf32>
    %9 = vector.extract_strided_slice %0 {offsets = [0, 96], sizes = [8, 32], strides = [1, 1]} : vector<8x128xf32> to vector<8x32xf32>
    %10 = tpu.concatenate %8, %9 in 1 : vector<8x32xf32>, vector<8x32xf32> -> vector<8x64xf32>
    %c0_6 = arith.constant 0 : index
    %c0_7 = arith.constant 0 : index
    %11 = vector.load %arg4[%c0_6, %c0_7] : memref<64x128xf32, #tpu.memory_space<vmem>>, vector<64x128xf32>
    %cst_8 = arith.constant dense<0.000000e+00> : vector<8x128xf32>
    %12 = tpu.matmul %10, %11, %cst_8 {dimension_numbers = #tpu.dot_dimension_numbers<[1], [0], [0], [1], [0, 0, 1, 1], [], []>} : vector<8x64xf32>, vector<64x128xf32>, vector<8x128xf32> -> vector<8x128xf32>
    %c0_9 = arith.constant 0 : index
    %c0_10 = arith.constant 0 : index
    %13 = vector.load %arg5[%c0_9, %c0_10] : memref<1x128xf32, #tpu.memory_space<vmem>>, vector<1x128xf32>
    %14 = vector.broadcast %13 : vector<1x128xf32> to vector<8x128xf32>
    %15 = arith.addf %12, %14 : vector<8x128xf32>
    %cst_11 = arith.constant 0.000000e+00 : f32
    %16 = vector.broadcast %cst_11 : f32 to vector<8x128xf32>
    %17 = arith.maximumf %15, %16 : vector<8x128xf32>
    %18 = tpu.concatenate %7, %17 in 1 : vector<8x64xf32>, vector<8x128xf32> -> vector<8x192xf32>
    %c0_12 = arith.constant 0 : index
    %c0_13 = arith.constant 0 : index
    %19 = vector.load %arg6[%c0_12, %c0_13] : memref<192x160xf32, #tpu.memory_space<vmem>>, vector<192x160xf32>
    %cst_14 = arith.constant dense<0.000000e+00> : vector<8x160xf32>
    %20 = tpu.matmul %18, %19, %cst_14 {dimension_numbers = #tpu.dot_dimension_numbers<[1], [0], [0], [1], [0, 0, 1, 1], [], []>} : vector<8x192xf32>, vector<192x160xf32>, vector<8x160xf32> -> vector<8x160xf32>
    %c0_15 = arith.constant 0 : index
    %c0_16 = arith.constant 0 : index
    %21 = vector.load %arg7[%c0_15, %c0_16] : memref<1x160xf32, #tpu.memory_space<vmem>>, vector<1x160xf32>
    %22 = vector.broadcast %21 : vector<1x160xf32> to vector<8x160xf32>
    %23 = arith.addf %20, %22 : vector<8x160xf32>
    %cst_17 = arith.constant 0.000000e+00 : f32
    %24 = vector.broadcast %cst_17 : f32 to vector<8x160xf32>
    %25 = arith.maximumf %23, %24 : vector<8x160xf32>
    %c0_18 = arith.constant 0 : index
    %c0_19 = arith.constant 0 : index
    %26 = vector.load %arg8[%c0_18, %c0_19] : memref<160x160xf32, #tpu.memory_space<vmem>>, vector<160x160xf32>
    %cst_20 = arith.constant dense<0.000000e+00> : vector<8x160xf32>
    %27 = tpu.matmul %25, %26, %cst_20 {dimension_numbers = #tpu.dot_dimension_numbers<[1], [0], [0], [1], [0, 0, 1, 1], [], []>} : vector<8x160xf32>, vector<160x160xf32>, vector<8x160xf32> -> vector<8x160xf32>
    %c0_21 = arith.constant 0 : index
    %c0_22 = arith.constant 0 : index
    %28 = vector.load %arg9[%c0_21, %c0_22] : memref<1x160xf32, #tpu.memory_space<vmem>>, vector<1x160xf32>
    %29 = vector.broadcast %28 : vector<1x160xf32> to vector<8x160xf32>
    %30 = arith.addf %27, %29 : vector<8x160xf32>
    %cst_23 = arith.constant 0.000000e+00 : f32
    %31 = vector.broadcast %cst_23 : f32 to vector<8x160xf32>
    %32 = arith.maximumf %30, %31 : vector<8x160xf32>
    %c0_24 = arith.constant 0 : index
    %c0_25 = arith.constant 0 : index
    %33 = vector.load %arg10[%c0_24, %c0_25] : memref<160x160xf32, #tpu.memory_space<vmem>>, vector<160x160xf32>
    %cst_26 = arith.constant dense<0.000000e+00> : vector<8x160xf32>
    %34 = tpu.matmul %32, %33, %cst_26 {dimension_numbers = #tpu.dot_dimension_numbers<[1], [0], [0], [1], [0, 0, 1, 1], [], []>} : vector<8x160xf32>, vector<160x160xf32>, vector<8x160xf32> -> vector<8x160xf32>
    %c0_27 = arith.constant 0 : index
    %c0_28 = arith.constant 0 : index
    %35 = vector.load %arg11[%c0_27, %c0_28] : memref<1x160xf32, #tpu.memory_space<vmem>>, vector<1x160xf32>
    %36 = vector.broadcast %35 : vector<1x160xf32> to vector<8x160xf32>
    %37 = arith.addf %34, %36 : vector<8x160xf32>
    %cst_29 = arith.constant 0.000000e+00 : f32
    %38 = vector.broadcast %cst_29 : f32 to vector<8x160xf32>
    %39 = arith.maximumf %37, %38 : vector<8x160xf32>
    %c0_30 = arith.constant 0 : index
    %c0_31 = arith.constant 0 : index
    %40 = vector.load %arg12[%c0_30, %c0_31] : memref<160x8xf32, #tpu.memory_space<vmem>>, vector<160x8xf32>
    %cst_32 = arith.constant dense<0.000000e+00> : vector<8x8xf32>
    %41 = tpu.matmul %39, %40, %cst_32 {dimension_numbers = #tpu.dot_dimension_numbers<[1], [0], [0], [1], [0, 0, 1, 1], [], []>} : vector<8x160xf32>, vector<160x8xf32>, vector<8x8xf32> -> vector<8x8xf32>
    %c0_33 = arith.constant 0 : index
    %c0_34 = arith.constant 0 : index
    %42 = vector.load %arg13[%c0_33, %c0_34] : memref<1x8xf32, #tpu.memory_space<vmem>>, vector<1x8xf32>
    %43 = vector.broadcast %42 : vector<1x8xf32> to vector<8x8xf32>
    %44 = arith.addf %41, %43 : vector<8x8xf32>
    %45 = tpu.iota {dimensions = array<i32: 1>} : vector<8x8xi32>
    %c2_i32 = arith.constant 2 : i32
    %46 = vector.broadcast %c2_i32 : i32 to vector<8x8xi32>
    %47 = arith.cmpi slt, %45, %46 : vector<8x8xi32>
    %c6_i32 = arith.constant 6 : i32
    %48 = vector.broadcast %c6_i32 : i32 to vector<8x8xi32>
    %49 = arith.cmpi sge, %45, %48 : vector<8x8xi32>
    %50 = arith.ori %47, %49 : vector<8x8xi1>
    %c4_i32 = arith.constant 4 : i32
    %51 = vector.broadcast %c4_i32 : i32 to vector<8x8xi32>
    %52 = arith.cmpi sge, %45, %51 : vector<8x8xi32>
    %c6_i32_35 = arith.constant 6 : i32
    %53 = vector.broadcast %c6_i32_35 : i32 to vector<8x8xi32>
    %54 = arith.cmpi slt, %45, %53 : vector<8x8xi32>
    %55 = arith.andi %52, %54 : vector<8x8xi1>
    %56 = arith.negf %44 : vector<8x8xf32>
    %57 = math.exp %56 : vector<8x8xf32>
    %cst_36 = arith.constant 1.000000e+00 : f32
    %58 = vector.broadcast %cst_36 : f32 to vector<8x8xf32>
    %59 = arith.addf %58, %57 : vector<8x8xf32>
    %60 = arith.divf %58, %59 : vector<8x8xf32>
    %cst_37 = arith.constant 5.000000e-01 : f32
    %61 = vector.broadcast %cst_37 : f32 to vector<8x8xf32>
    %62 = arith.mulf %61, %44 : vector<8x8xf32>
    %63 = arith.select %55, %62, %44 : vector<8x8xi1>, vector<8x8xf32>
    %64 = arith.select %50, %60, %63 : vector<8x8xi1>, vector<8x8xf32>
    %c0_38 = arith.constant 0 : index
    %c0_39 = arith.constant 0 : index
    %65 = vector.load %arg14[%c0_38, %c0_39] : memref<8x8xf32, #tpu.memory_space<vmem>>, vector<8x8xf32>
    tpu.vector_store %arg14[%c0_38, %c0_39], %64 {strides = array<i32>} : memref<8x8xf32, #tpu.memory_space<vmem>>, vector<8x8xf32>,
    return
  }
  func.func @transform_0(%arg0: i32) -> (i32, i32) {
    %c0_i32 = arith.constant 0 : i32
    %c0_i32_0 = arith.constant 0 : i32
    return %arg0, %c0_i32 : i32, i32
  }
  func.func @transform_1(%arg0: i32) -> (i32, i32) {
    %c0_i32 = arith.constant 0 : i32
    %c0_i32_0 = arith.constant 0 : i32
    %c0_i32_1 = arith.constant 0 : i32
    return %c0_i32, %c0_i32_0 : i32, i32
  }
  func.func @transform_2(%arg0: i32) -> (i32, i32) {
    %c0_i32 = arith.constant 0 : i32
    %c0_i32_0 = arith.constant 0 : i32
    %c0_i32_1 = arith.constant 0 : i32
    return %c0_i32, %c0_i32_0 : i32, i32
  }
  func.func @transform_3(%arg0: i32) -> (i32, i32) {
    %c0_i32 = arith.constant 0 : i32
    %c0_i32_0 = arith.constant 0 : i32
    %c0_i32_1 = arith.constant 0 : i32
    return %c0_i32, %c0_i32_0 : i32, i32
  }
  func.func @transform_4(%arg0: i32) -> (i32, i32) {
    %c0_i32 = arith.constant 0 : i32
    %c0_i32_0 = arith.constant 0 : i32
    %c0_i32_1 = arith.constant 0 : i32
    return %c0_i32, %c0_i32_0 : i32, i32
  }
  func.func @transform_5(%arg0: i32) -> (i32, i32) {
    %c0_i32 = arith.constant 0 : i32
    %c0_i32_0 = arith.constant 0 : i32
    %c0_i32_1 = arith.constant 0 : i32
    return %c0_i32, %c0_i32_0 : i32, i32
  }
  func.func @transform_6(%arg0: i32) -> (i32, i32) {
    %c0_i32 = arith.constant 0 : i32
    %c0_i32_0 = arith.constant 0 : i32
    %c0_i32_1 = arith.constant 0 : i32
    return %c0_i32, %c0_i32_0 : i32, i32
  }
  func.func @transform_7(%arg0: i32) -> (i32, i32) {
    %c0_i32 = arith.constant 0 : i32
    %c0_i32_0 = arith.constant 0 : i32
    %c0_i32_1 = arith.constant 0 : i32
    return %c0_i32, %c0_i32_0 : i32, i32
  }
  func.func @transform_8(%arg0: i32) -> (i32, i32) {
    %c0_i32 = arith.constant 0 : i32
    %c0_i32_0 = arith.constant 0 : i32
    %c0_i32_1 = arith.constant 0 : i32
    return %c0_i32, %c0_i32_0 : i32, i32
  }
  func.func @transform_9(%arg0: i32) -> (i32, i32) {
    %c0_i32 = arith.constant 0 : i32
    %c0_i32_0 = arith.constant 0 : i32
    %c0_i32_1 = arith.constant 0 : i32
    return %c0_i32, %c0_i32_0 : i32, i32
  }
  func.func @transform_10(%arg0: i32) -> (i32, i32) {
    %c0_i32 = arith.constant 0 : i32
    %c0_i32_0 = arith.constant 0 : i32
    %c0_i32_1 = arith.constant 0 : i32
    return %c0_i32, %c0_i32_0 : i32, i32
  }
  func.func @transform_11(%arg0: i32) -> (i32, i32) {
    %c0_i32 = arith.constant 0 : i32
    %c0_i32_0 = arith.constant 0 : i32
    %c0_i32_1 = arith.constant 0 : i32
    return %c0_i32, %c0_i32_0 : i32, i32
  }
  func.func @transform_12(%arg0: i32) -> (i32, i32) {
    %c0_i32 = arith.constant 0 : i32
    %c0_i32_0 = arith.constant 0 : i32
    %c0_i32_1 = arith.constant 0 : i32
    return %c0_i32, %c0_i32_0 : i32, i32
  }
  func.func @transform_13(%arg0: i32) -> (i32, i32) {
    %c0_i32 = arith.constant 0 : i32
    %c0_i32_0 = arith.constant 0 : i32
    return %arg0, %c0_i32 : i32, i32
  }
}

</mosaic_0001>

<llo_original>
// kernel: pem_forward.2
$region0: #{pem_forward.2}
  #allocation0 [shape = 'u32[]', space=smem, size = 0x4, offset = 0x4, fixed_abs, tag = 'smem constant byte address 0x4 - core index']
  #allocation1 [shape = 'u32[144,128]{1,0:T(1,128)}', space=vmem, size = 0x12000, scoped, tag = 'internal scratch']
  #allocation2 [shape = 'f32[64,16]{1,0:T(8,128)}', space=vmem, size = 0x8000, scoped, tag = 'scratch operand']
  %s0 = inlined_call_operand.vmem [shape: f32[64,96], index: 0, kind: input, shape index: {}]
  %s1 = inlined_call_operand.vmem [shape: f32[96,16], index: 1, kind: input, shape index: {}]
  %s2 = inlined_call_operand.vmem [shape: f32[1,16], index: 2, kind: input, shape index: {}]
  %s3 = inlined_call_operand.vmem [shape: f32[2,8,4,32], index: 3, kind: input, shape index: {}]
  %s4 = inlined_call_operand.vmem [shape: f32[2,4,128], index: 4, kind: output, shape index: {}]
  %s5 = sld [smem:[#allocation0]]
  $region53: #{pem_forward.2} parent=0
    _
  %s7 = ssub.s32 1, %s5
  %s8 = scalar_select 0, %s7, %s5
  loop: start=0, step=1, limit=4
  $region2: #{pem_forward.2} parent=0 // loop_pre_header
    _
  $region3: #{pem_forward.2} parent=0 // loop_header
    %s10 = sphi 0, %s14
    %p11 = scmp.ge.s32.totalorder %s10, 4
    %s18 = sphi 0, %s18
    %s20 = sphi 0, %s18
    %s21 = sphi 0, %s20
    %s35 = sphi 0, %s21
    %s39 = sphi 0, %s39
    %s41 = sphi 0, %s39
    %s42 = sphi 0, %s41
    %s56 = sphi 0, %s42
    %s60 = sphi 0, %s60
    %s62 = sphi 0, %s60
    %s63 = sphi 0, %s62
    %s77 = sphi 0, %s63
    %s83 = sphi 0, %s85
    %s86 = sphi 0, %s83
    %s87 = sphi 0, %s86
    %s103 = sphi 0, %s87
    %s109 = sphi 0, %s111
    %s112 = sphi 0, %s109
    %s113 = sphi 0, %s112
    %s129 = sphi 0, %s113
  $region4: #{pem_forward.2} parent=0 // loop_header_branch
    %13 = sbr.rel (%p11) target = $region8
  $region5: #{pem_forward.2} parent=0 // loop_body
    %s15 = ssub.s32 %s10, 1
    %s16 = ssub.s32 %s10, 2
    %s17 = sadd.s32 %s10, 1
    %s19 = sadd.s32 %s18, 1
    %p22 = scmp.eq.s32.totalorder %s10, 1
    %p23 = scmp.ne.s32.totalorder %s18, %s20
    %p24 = scmp.eq.s32.totalorder %s10, 0
    %p25 = por %p23, %p24
    %p26 = scmp.ne.s32.totalorder %s18, %s20
    %p27 = scmp.eq.s32.totalorder %s15, 1
    %p28 = por %p26, %p27
    %p29 = scmp.ne.s32.totalorder %s20, %s21
    %p30 = scmp.eq.s32.totalorder %s15, 0
    %p31 = por %p29, %p30
    %p32 = scmp.ne.s32.totalorder %s20, %s21
    %p33 = scmp.eq.s32.totalorder %s16, 1
    %p34 = por %p32, %p33
    %p36 = scmp.ne.s32.totalorder %s21, %s35
    %p37 = scmp.eq.s32.totalorder %s16, 0
    %p38 = por %p36, %p37
    %s40 = sadd.s32 %s39, 1
    %p43 = scmp.eq.s32.totalorder %s10, 1
    %p44 = scmp.ne.s32.totalorder %s39, %s41
    %p45 = scmp.eq.s32.totalorder %s10, 0
    %p46 = por %p44, %p45
    %p47 = scmp.ne.s32.totalorder %s39, %s41
    %p48 = scmp.eq.s32.totalorder %s15, 1
    %p49 = por %p47, %p48
    %p50 = scmp.ne.s32.totalorder %s41, %s42
    %p51 = scmp.eq.s32.totalorder %s15, 0
    %p52 = por %p50, %p51
    %p53 = scmp.ne.s32.totalorder %s41, %s42
    %p54 = scmp.eq.s32.totalorder %s16, 1
    %p55 = por %p53, %p54
    %p57 = scmp.ne.s32.totalorder %s42, %s56
    %p58 = scmp.eq.s32.totalorder %s16, 0
    %p59 = por %p57, %p58
    %s61 = sadd.s32 %s60, 1
    %p64 = scmp.eq.s32.totalorder %s10, 1
    %p65 = scmp.ne.s32.totalorder %s60, %s62
    %p66 = scmp.eq.s32.totalorder %s10, 0
    %p67 = por %p65, %p66
    %p68 = scmp.ne.s32.totalorder %s60, %s62
    %p69 = scmp.eq.s32.totalorder %s15, 1
    %p70 = por %p68, %p69
    %p71 = scmp.ne.s32.totalorder %s62, %s63
    %p72 = scmp.eq.s32.totalorder %s15, 0
    %p73 = por %p71, %p72
    %p74 = scmp.ne.s32.totalorder %s62, %s63
    %p75 = scmp.eq.s32.totalorder %s16, 1
    %p76 = por %p74, %p75
    %p78 = scmp.ne.s32.totalorder %s63, %s77
    %p79 = scmp.eq.s32.totalorder %s16, 0
    %p80 = por %p78, %p79
    %s81 = ssub.s32 %s10, %s17
    %p82 = scmp.eq.s32.totalorder %s81, 0
    %s84 = sadd.s32 %s83, 1
    %s85 = scalar_select %p82, %s83, %s84
    %p88 = pneg %p82
    %p89 = scmp.eq.s32.totalorder %s10, 1
    %p90 = por %p88, %p89
    %p91 = scmp.ne.s32.totalorder %s83, %s86
    %p92 = scmp.eq.s32.totalorder %s10, 0
    %p93 = por %p91, %p92
    %p94 = scmp.ne.s32.totalorder %s83, %s86
    %p95 = scmp.eq.s32.totalorder %s15, 1
    %p96 = por %p94, %p95
    %p97 = scmp.ne.s32.totalorder %s86, %s87
    %p98 = scmp.eq.s32.totalorder %s15, 0
    %p99 = por %p97, %p98
    %p100 = scmp.ne.s32.totalorder %s86, %s87
    %p101 = scmp.eq.s32.totalorder %s16, 1
    %p102 = por %p100, %p101
    %p104 = scmp.ne.s32.totalorder %s87, %s103
    %p105 = scmp.eq.s32.totalorder %s16, 0
    %p106 = por %p104, %p105
    %s107 = ssub.s32 %s10, %s17
    %p108 = scmp.eq.s32.totalorder %s107, 0
    %s110 = sadd.s32 %s109, 1
    %s111 = scalar_select %p108, %s109, %s110
    %p114 = pneg %p108
    %p115 = scmp.eq.s32.totalorder %s10, 1
    %p116 = por %p114, %p115
    %p117 = scmp.ne.s32.totalorder %s109, %s112
    %p118 = scmp.eq.s32.totalorder %s10, 0
    %p119 = por %p117, %p118
    %p120 = scmp.ne.s32.totalorder %s109, %s112
    %p121 = scmp.eq.s32.totalorder %s15, 1
    %p122 = por %p120, %p121
    %p123 = scmp.ne.s32.totalorder %s112, %s113
    %p124 = scmp.eq.s32.totalorder %s15, 0
    %p125 = por %p123, %p124
    %p126 = scmp.ne.s32.totalorder %s112, %s113
    %p127 = scmp.eq.s32.totalorder %s16, 1
    %p128 = por %p126, %p127
    %p130 = scmp.ne.s32.totalorder %s113, %s129
    %p131 = scmp.eq.s32.totalorder %s16, 0
    %p132 = por %p130, %p131
    %p133 = scmp.le.s32.totalorder 1, %s10
    %p134 = scmp.lt.s32.totalorder %s10, 3
    %p135 = pnand %p133, %p134
    %p136 = pneg %p135
    // Predicated region
    $region9: #{pem_forward.2} parent=5 // pred_check
      _
    $region10: #{pem_forward.2} parent=5 // pred_check_branch
      %138 = sbr.rel (%p135) target = $region12
    $region11: #{pem_forward.2} parent=5 // pred_region
      %s139 = ssub.s32 %s10, 1
      // Predicated region
      $region13: #{pem_forward.2} parent=11 // pred_check
        %p140 = pneg %p31
      $region14: #{pem_forward.2} parent=11 // pred_check_branch
        %142 = sbr.rel (%p140) target = $region16
      $region15: #{pem_forward.2} parent=11 // pred_region
        _
      $region16: #{pem_forward.2} parent=11 // pred_fallthru
        _
      // Predicated region
      $region17: #{pem_forward.2} parent=11 // pred_check
        %p143 = pneg %p52
      $region18: #{pem_forward.2} parent=11 // pred_check_branch
        %145 = sbr.rel (%p143) target = $region20
      $region19: #{pem_forward.2} parent=11 // pred_region
        _
      $region20: #{pem_forward.2} parent=11 // pred_fallthru
        _
      // Predicated region
      $region21: #{pem_forward.2} parent=11 // pred_check
        %p146 = pneg %p73
      $region22: #{pem_forward.2} parent=11 // pred_check_branch
        %148 = sbr.rel (%p146) target = $region24
      $region23: #{pem_forward.2} parent=11 // pred_region
        _
      $region24: #{pem_forward.2} parent=11 // pred_fallthru
        _
    $region12: #{pem_forward.2} parent=5 // pred_fallthru
      _
    %p149 = scmp.lt.s32.totalorder %s10, 2
    // Predicated region
    $region25: #{pem_forward.2} parent=5 // pred_check
      %p150 = pneg %p149
    $region26: #{pem_forward.2} parent=5 // pred_check_branch
      %152 = sbr.rel (%p150) target = $region28
    $region27: #{pem_forward.2} parent=5 // pred_region
      // Predicated region
      $region29: #{pem_forward.2} parent=27 // pred_check
        %p153 = pneg %p93
      $region30: #{pem_forward.2} parent=27 // pred_check_branch
        %155 = sbr.rel (%p153) target = $region32
      $region31: #{pem_forward.2} parent=27 // pred_region
        %p156 = scmp.lt.s32.totalorder %s10, 1
        %s157 = scalar_select %p156, %s10, 1
        %s158 = smul.addr %s157, 8
        %s159 = smul.addr %s158, 4
        %s160 = scalar_lea.vmem %s3, %s159
      $region32: #{pem_forward.2} parent=27 // pred_fallthru
        _
    $region28: #{pem_forward.2} parent=5 // pred_fallthru
      _
    %p161 = scmp.le.s32.totalorder 1, %s10
    %p162 = scmp.lt.s32.totalorder %s10, 3
    %p163 = pnand %p161, %p162
    %p164 = pneg %p163
    // Predicated region
    $region33: #{pem_forward.2} parent=5 // pred_check
      _
    $region34: #{pem_forward.2} parent=5 // pred_check_branch
      %166 = sbr.rel (%p163) target = $region36
    $region35: #{pem_forward.2} parent=5 // pred_region
      %s167 = ssub.s32 %s10, 1
      %p168 = pneg %p31
      %p169 = pneg %p28
      %p170 = pneg %p52
      %p171 = pneg %p49
      %p172 = pneg %p73
      %p173 = pneg %p70
      %p174 = scmp.lt.s32.totalorder %s15, 1
      %s175 = scalar_select %p174, %s15, 1
      %s176 = smul.addr %s175, 8
      %s177 = smul.addr %s176, 4
      %s178 = scalar_lea.vmem %s3, %s177
      %p179 = pneg %p99
      %p180 = pneg %p96
      %p181 = pneg %p125
      %p182 = pneg %p122
      %p183 = scmp.lt.s32.totalorder %s15, 1
      %s184 = scalar_select %p183, %s15, 1
      %s185 = smul.addr %s184, 4
      %s186 = scalar_lea.vmem %s4, %s185
      %p187 = scmp.lt.s32.totalorder %s15, 1
      %s188 = scalar_select %p187, %s15, 1
      %s189 = smul.addr %s188, 8
      %s190 = smul.addr %s189, 4
      %s191 = scalar_lea.vmem %s3, %s190
      %p192 = scmp.lt.s32.totalorder %s15, 1
      %s193 = scalar_select %p192, %s15, 1
      %s194 = smul.addr %s193, 4
      %s195 = scalar_lea.vmem %s4, %s194
      %p196 = scmp.eq.s32.totalorder %s15, 0
      // Predicated region
      $region37: #{pem_forward.2} parent=35 // pred_check
        %p197 = pneg %p196
      $region38: #{pem_forward.2} parent=35 // pred_check_branch
        %199 = sbr.rel (%p197) target = $region40
      $region39: #{pem_forward.2} parent=35 // pred_region
        %v200 = vld [vmem:[%s0] sm:$0xff]
        %v201 = vld [vmem:[%s0 + $0x8] sm:$0xff]
        %v202 = vld [vmem:[%s0 + $0x10] sm:$0xff]
        %v203 = vld [vmem:[%s0 + $0x18] sm:$0xff]
        %v204 = vld [vmem:[%s0 + $0x20] sm:$0xff]
        %v205 = vld [vmem:[%s0 + $0x28] sm:$0xff]
        %v206 = vld [vmem:[%s0 + $0x30] sm:$0xff]
        %v207 = vld [vmem:[%s0 + $0x38] sm:$0xff]
        %v208 = vld [vmem:[%s1] sm:$0xff]
        %v209 = vld [vmem:[%s1 + $0x8] sm:$0xff]
        %v210 = vld [vmem:[%s1 + $0x10] sm:$0xff]
        %v211 = vld [vmem:[%s1 + $0x18] sm:$0xff]
        %v212 = vld [vmem:[%s1 + $0x20] sm:$0xff]
        %v213 = vld [vmem:[%s1 + $0x28] sm:$0xff]
        %v214 = vld [vmem:[%s1 + $0x30] sm:$0xff]
        %v215 = vld [vmem:[%s1 + $0x38] sm:$0xff]
        %v216 = vld [vmem:[%s1 + $0x40] sm:$0xff]
        %v217 = vld [vmem:[%s1 + $0x48] sm:$0xff]
        %v218 = vld [vmem:[%s1 + $0x50] sm:$0xff]
        %v219 = vld [vmem:[%s1 + $0x58] sm:$0xff]
        %v220 = vld [vmem:[%s2] sm:$0x1]
        %v222 = vlaneseq
        %v223 = vshrl.u32 %v222, 7
        %v224 = vsub.s32 0, %v223
        %v225 = vrot.slane %v220, %v224
        %vm227 = vcmask 785408
        %v229 = vsel %vm227, %v200, 0
        %v232 = vsel %vm227, %v201, 0
        %v235 = vsel %vm227, %v202, 0
        %v238 = vsel %vm227, %v203, 0
        %v241 = vsel %vm227, %v204, 0
        %v244 = vsel %vm227, %v205, 0
        %v247 = vsel %vm227, %v206, 0
        %v250 = vsel %vm227, %v207, 0
        %252 = vmatprep.subr.mxu0 0.0
        %253 = vmatpush1.msra.mxu0 %v208
        %254 = vmatprep.subr.mxu0 0.0
        %255 = vmatpush1.msra.mxu0 %v209
        %256 = vmatprep.subr.mxu0 0.0
        %257 = vmatpush1.msra.mxu0 %v210
        %258 = vmatprep.subr.mxu0 0.0
        %259 = vmatpush1.msra.mxu0 %v211
        %260 = vmatprep.subr.mxu0 0.0
        %261 = vmatpush1.msra.mxu0 %v212
        %262 = vmatprep.subr.mxu0 0.0
        %263 = vmatpush1.msra.mxu0 %v213
        %264 = vmatprep.subr.mxu0 0.0
        %265 = vmatpush1.msra.mxu0 %v214
        %266 = vmatprep.subr.mxu0 0.0
        %267 = vmatpush1.msra.mxu0 %v215
        %268 = vmatprep.subr.mxu0 0.0
        %269 = vmatpush1.msra.mxu0 %v216
        %270 = vmatprep.subr.mxu0 0.0
        %271 = vmatpush1.msra.mxu0 %v217
        %272 = vmatprep.subr.mxu0 0.0
        %273 = vmatpush1.msra.mxu0 %v218
        %274 = vmatprep.subr.mxu0 0.0
        %275 = vmatpush1.msra.mxu0 %v219
        %276 = vmatprep.subr.mxu0 0.0
        %277 = vmatpush1.msra.mxu0 0.0
        %278 = vmatprep.subr.mxu0 0.0
        %279 = vmatpush1.msra.mxu0 0.0
        %280 = vmatprep.subr.mxu0 0.0
        %281 = vmatpush1.msra.mxu0 0.0
        %282 = vmatprep.subr.mxu0 0.0
        %283 = vmatpush1.msra.mxu0 0.0
        %284 = vmatprep.subr.mxu0 0.0
        %285 = vmatpush1.msra.mxu0 0.0
        %286 = vmatprep.subr.mxu0 0.0
        %287 = vmatpush1.msra.mxu0 0.0
        %288 = vmatprep.subr.mxu0 0.0
        %289 = vmatpush1.msra.mxu0 0.0
        %290 = vmatprep.subr.mxu0 0.0
        %291 = vmatpush1.msra.mxu0 0.0
        %292 = vmatprep.subr.mxu0 0.0
        %293 = vmatpush1.msra.mxu0 0.0
        %294 = vmatprep.subr.mxu0 0.0
        %295 = vmatpush1.msra.mxu0 0.0
        %296 = vmatprep.subr.mxu0 0.0
        %297 = vmatpush1.msra.mxu0 0.0
        %298 = vmatprep.subr.mxu0 0.0
        %299 = vmatpush1.msra.mxu0 0.0
        %300 = vmatprep.subr.mxu0 0.0
        %301 = vmatpush1.msra.mxu0 0.0
        %302 = vmatprep.subr.mxu0 0.0
        %303 = vmatpush1.msra.mxu0 0.0
        %304 = vmatprep.subr.mxu0 0.0
        %305 = vmatpush1.msra.mxu0 0.0
        %306 = vmatprep.subr.mxu0 0.0
        %307 = vmatpush1.msra.mxu0 0.0
        %308 = vmatprep.subr.mxu0 0.0
        %309 = vmatpush1.msra.mxu0 0.0
        %310 = vmatprep.subr.mxu0 0.0
        %311 = vmatpush1.msra.mxu0 0.0
        %312 = vmatprep.subr.mxu0 0.0
        %313 = vmatpush1.msra.mxu0 0.0
        %314 = vmatprep.subr.mxu0 0.0
        %315 = vmatpush1.msra.mxu0 0.0
        %316 = vmatprep.mubr.f32.mxu0 0.0
        %317 = vmatmul.mubr.f32.gmra.mrb[0].mxu0 %v229
        %v318 = vpop.f32.mrb[0].mxu0
        %v319 = vadd.f32 %v225, %v318
        %v320 = vpop.f32.mrb[0].mxu0
        %321 = vmatprep.mubr.f32.mxu0 0.0
        %322 = vmatmul.mubr.f32.gmra.mrb[0].mxu0 %v232
        %v323 = vpop.f32.mrb[0].mxu0
        %v324 = vadd.f32 %v225, %v323
        %v325 = vpop.f32.mrb[0].mxu0
        %326 = vmatprep.mubr.f32.mxu0 0.0
        %327 = vmatmul.mubr.f32.gmra.mrb[0].mxu0 %v235
        %v328 = vpop.f32.mrb[0].mxu0
        %v329 = vadd.f32 %v225, %v328
        %v330 = vpop.f32.mrb[0].mxu0
        %331 = vmatprep.mubr.f32.mxu0 0.0
        %332 = vmatmul.mubr.f32.gmra.mrb[0].mxu0 %v238
        %v333 = vpop.f32.mrb[0].mxu0
        %v334 = vadd.f32 %v225, %v333
        %v335 = vpop.f32.mrb[0].mxu0
        %336 = vmatprep.mubr.f32.mxu0 0.0
        %337 = vmatmul.mubr.f32.gmra.mrb[0].mxu0 %v241
        %v338 = vpop.f32.mrb[0].mxu0
        %v339 = vadd.f32 %v225, %v338
        %v340 = vpop.f32.mrb[0].mxu0
        %341 = vmatprep.mubr.f32.mxu0 0.0
        %342 = vmatmul.mubr.f32.gmra.mrb[0].mxu0 %v244
        %v343 = vpop.f32.mrb[0].mxu0
        %v344 = vadd.f32 %v225, %v343
        %v345 = vpop.f32.mrb[0].mxu0
        %346 = vmatprep.mubr.f32.mxu0 0.0
        %347 = vmatmul.mubr.f32.gmra.mrb[0].mxu0 %v247
        %v348 = vpop.f32.mrb[0].mxu0
        %v349 = vadd.f32 %v225, %v348
        %v350 = vpop.f32.mrb[0].mxu0
        %351 = vmatprep.mubr.f32.mxu0 0.0
        %352 = vmatmul.mubr.f32.gmra.mrb[0].mxu0 %v250
        %v353 = vpop.f32.mrb[0].mxu0
        %v354 = vadd.f32 %v225, %v353
        %v355 = vpop.f32.mrb[0].mxu0
        %356 = vdwg.mxu0
        %v357 = vmax.f32 %v319, 0.0
        %v358 = vmax.f32 %v324, 0.0
        %v359 = vmax.f32 %v329, 0.0
        %v360 = vmax.f32 %v334, 0.0
        %v361 = vmax.f32 %v339, 0.0
        %v362 = vmax.f32 %v344, 0.0
        %v363 = vmax.f32 %v349, 0.0
        %v364 = vmax.f32 %v354, 0.0
        %vm365 = vcmask 130048
        %366 = vst.msk [vmem:[#allocation2] sm:$0xff] %vm365, %v357
        %367 = vst.msk [vmem:[#allocation2 + $0x8] sm:$0xff] %vm365, %v358
        %368 = vst.msk [vmem:[#allocation2 + $0x10] sm:$0xff] %vm365, %v359
        %369 = vst.msk [vmem:[#allocation2 + $0x18] sm:$0xff] %vm365, %v360
        %370 = vst.msk [vmem:[#allocation2 + $0x20] sm:$0xff] %vm365, %v361
        %371 = vst.msk [vmem:[#allocation2 + $0x28] sm:$0xff] %vm365, %v362
        %372 = vst.msk [vmem:[#allocation2 + $0x30] sm:$0xff] %vm365, %v363
        %373 = vst.msk [vmem:[#allocation2 + $0x38] sm:$0xff] %vm365, %v364
      $region40: #{pem_forward.2} parent=35 // pred_fallthru
        _
      %s374 = smul.u32 %s15, 32
      %s375 = scalar_lea.vmem [#allocation2], %s374
      %v376 = vld [vmem:[%s375] sm:$0xff]
      %v377 = vld [vmem:[%s375 + $0x8] sm:$0xff]
      %v378 = vld [vmem:[%s375 + $0x10] sm:$0xff]
      %v379 = vld [vmem:[%s375 + $0x18] sm:$0xff]
      %v380 = vld [vmem:[%s191] sm:$0xf]
      %vm381 = vcmask 261120
      %v383 = vsel %vm381, %v380, 0
      %385 = vmatprep.subr.mxu0 0.0
      %386 = vmatpush1.msra.mxu0 %v376
      %387 = vmatprep.subr.mxu0 0.0
      %388 = vmatpush1.msra.mxu0 %v377
      %389 = vmatprep.subr.mxu0 0.0
      %390 = vmatpush1.msra.mxu0 %v378
      %391 = vmatprep.subr.mxu0 0.0
      %392 = vmatpush1.msra.mxu0 %v379
      %393 = vmatprep.subr.mxu0 0.0
      %394 = vmatpush1.msra.mxu0 0.0
      %395 = vmatprep.subr.mxu0 0.0
      %396 = vmatpush1.msra.mxu0 0.0
      %397 = vmatprep.subr.mxu0 0.0
      %398 = vmatpush1.msra.mxu0 0.0
      %399 = vmatprep.subr.mxu0 0.0
      %400 = vmatpush1.msra.mxu0 0.0
      %401 = vmatprep.subr.mxu0 0.0
      %402 = vmatpush1.msra.mxu0 0.0
      %403 = vmatprep.subr.mxu0 0.0
      %404 = vmatpush1.msra.mxu0 0.0
      %405 = vmatprep.subr.mxu0 0.0
      %406 = vmatpush1.msra.mxu0 0.0
      %407 = vmatprep.subr.mxu0 0.0
      %408 = vmatpush1.msra.mxu0 0.0
      %409 = vmatprep.subr.mxu0 0.0
      %410 = vmatpush1.msra.mxu0 0.0
      %411 = vmatprep.subr.mxu0 0.0
      %412 = vmatpush1.msra.mxu0 0.0
      %413 = vmatprep.subr.mxu0 0.0
      %414 = vmatpush1.msra.mxu0 0.0
      %415 = vmatprep.subr.mxu0 0.0
      %416 = vmatpush1.msra.mxu0 0.0
      %417 = vmatprep.subr.mxu0 0.0
      %418 = vmatpush1.msra.mxu0 0.0
      %419 = vmatprep.subr.mxu0 0.0
      %420 = vmatpush1.msra.mxu0 0.0
      %421 = vmatprep.subr.mxu0 0.0
      %422 = vmatpush1.msra.mxu0 0.0
      %423 = vmatprep.subr.mxu0 0.0
      %424 = vmatpush1.msra.mxu0 0.0
      %425 = vmatprep.subr.mxu0 0.0
      %426 = vmatpush1.msra.mxu0 0.0
      %427 = vmatprep.subr.mxu0 0.0
      %428 = vmatpush1.msra.mxu0 0.0
      %429 = vmatprep.subr.mxu0 0.0
      %430 = vmatpush1.msra.mxu0 0.0
      %431 = vmatprep.subr.mxu0 0.0
      %432 = vmatpush1.msra.mxu0 0.0
      %433 = vmatprep.subr.mxu0 0.0
      %434 = vmatpush1.msra.mxu0 0.0
      %435 = vmatprep.subr.mxu0 0.0
      %436 = vmatpush1.msra.mxu0 0.0
      %437 = vmatprep.subr.mxu0 0.0
      %438 = vmatpush1.msra.mxu0 0.0
      %439 = vmatprep.subr.mxu0 0.0
      %440 = vmatpush1.msra.mxu0 0.0
      %441 = vmatprep.subr.mxu0 0.0
      %442 = vmatpush1.msra.mxu0 0.0
      %443 = vmatprep.subr.mxu0 0.0
      %444 = vmatpush1.msra.mxu0 0.0
      %445 = vmatprep.subr.mxu0 0.0
      %446 = vmatpush1.msra.mxu0 0.0
      %447 = vmatprep.subr.mxu0 0.0
      %448 = vmatpush1.msra.mxu0 0.0
      %449 = vmatprep.mubr.f32.mxu0 0.0
      %450 = vmatmul.mubr.f32.gmra.mrb[0].mxu0 %v383
      %v451 = vpop.f32.mrb[0].mxu0
      %v452 = vadd.f32 0.0, %v451
      %v453 = vpop.f32.mrb[0].mxu0
      %454 = vdwg.mxu0
      %s455 = scalar_lea.vmem %s191, 4
      %v456 = vld [vmem:[%s455] sm:$0xf]
      %v458 = vsel %vm381, %v456, 0
      %460 = vmatprep.subr.mxu0 0.0
      %461 = vmatpush1.msra.mxu0 %v376
      %462 = vmatprep.subr.mxu0 0.0
      %463 = vmatpush1.msra.mxu0 %v377
      %464 = vmatprep.subr.mxu0 0.0
      %465 = vmatpush1.msra.mxu0 %v378
      %466 = vmatprep.subr.mxu0 0.0
      %467 = vmatpush1.msra.mxu0 %v379
      %468 = vmatprep.subr.mxu0 0.0
      %469 = vmatpush1.msra.mxu0 0.0
      %470 = vmatprep.subr.mxu0 0.0
      %471 = vmatpush1.msra.mxu0 0.0
      %472 = vmatprep.subr.mxu0 0.0
      %473 = vmatpush1.msra.mxu0 0.0
      %474 = vmatprep.subr.mxu0 0.0
      %475 = vmatpush1.msra.mxu0 0.0
      %476 = vmatprep.subr.mxu0 0.0
      %477 = vmatpush1.msra.mxu0 0.0
      %478 = vmatprep.subr.mxu0 0.0
      %479 = vmatpush1.msra.mxu0 0.0
      %480 = vmatprep.subr.mxu0 0.0
      %481 = vmatpush1.msra.mxu0 0.0
      %482 = vmatprep.subr.mxu0 0.0
      %483 = vmatpush1.msra.mxu0 0.0
      %484 = vmatprep.subr.mxu0 0.0
      %485 = vmatpush1.msra.mxu0 0.0
      %486 = vmatprep.subr.mxu0 0.0
      %487 = vmatpush1.msra.mxu0 0.0
      %488 = vmatprep.subr.mxu0 0.0
      %489 = vmatpush1.msra.mxu0 0.0
      %490 = vmatprep.subr.mxu0 0.0
      %491 = vmatpush1.msra.mxu0 0.0
      %492 = vmatprep.subr.mxu0 0.0
      %493 = vmatpush1.msra.mxu0 0.0
      %494 = vmatprep.subr.mxu0 0.0
      %495 = vmatpush1.msra.mxu0 0.0
      %496 = vmatprep.subr.mxu0 0.0
      %497 = vmatpush1.msra.mxu0 0.0
      %498 = vmatprep.subr.mxu0 0.0
      %499 = vmatpush1.msra.mxu0 0.0
      %500 = vmatprep.subr.mxu0 0.0
      %501 = vmatpush1.msra.mxu0 0.0
      %502 = vmatprep.subr.mxu0 0.0
      %503 = vmatpush1.msra.mxu0 0.0
      %504 = vmatprep.subr.mxu0 0.0
      %505 = vmatpush1.msra.mxu0 0.0
      %506 = vmatprep.subr.mxu0 0.0
      %507 = vmatpush1.msra.mxu0 0.0
      %508 = vmatprep.subr.mxu0 0.0
      %509 = vmatpush1.msra.mxu0 0.0
      %510 = vmatprep.subr.mxu0 0.0
      %511 = vmatpush1.msra.mxu0 0.0
      %512 = vmatprep.subr.mxu0 0.0
      %513 = vmatpush1.msra.mxu0 0.0
      %514 = vmatprep.subr.mxu0 0.0
      %515 = vmatpush1.msra.mxu0 0.0
      %516 = vmatprep.subr.mxu0 0.0
      %517 = vmatpush1.msra.mxu0 0.0
      %518 = vmatprep.subr.mxu0 0.0
      %519 = vmatpush1.msra.mxu0 0.0
      %520 = vmatprep.subr.mxu0 0.0
      %521 = vmatpush1.msra.mxu0 0.0
      %522 = vmatprep.subr.mxu0 0.0
      %523 = vmatpush1.msra.mxu0 0.0
      %524 = vmatprep.mubr.f32.mxu0 0.0
      %525 = vmatmul.mubr.f32.gmra.mrb[0].mxu0 %v458
      %v526 = vpop.f32.mrb[0].mxu0
      %v527 = vadd.f32 0.0, %v526
      %v528 = vpop.f32.mrb[0].mxu0
      %529 = vdwg.mxu0
      %s530 = scalar_lea.vmem %s191, 8
      %v531 = vld [vmem:[%s530] sm:$0xf]
      %v533 = vsel %vm381, %v531, 0
      %535 = vmatprep.subr.mxu0 0.0
      %536 = vmatpush1.msra.mxu0 %v376
      %537 = vmatprep.subr.mxu0 0.0
      %538 = vmatpush1.msra.mxu0 %v377
      %539 = vmatprep.subr.mxu0 0.0
      %540 = vmatpush1.msra.mxu0 %v378
      %541 = vmatprep.subr.mxu0 0.0
      %542 = vmatpush1.msra.mxu0 %v379
      %543 = vmatprep.subr.mxu0 0.0
      %544 = vmatpush1.msra.mxu0 0.0
      %545 = vmatprep.subr.mxu0 0.0
      %546 = vmatpush1.msra.mxu0 0.0
      %547 = vmatprep.subr.mxu0 0.0
      %548 = vmatpush1.msra.mxu0 0.0
      %549 = vmatprep.subr.mxu0 0.0
      %550 = vmatpush1.msra.mxu0 0.0
      %551 = vmatprep.subr.mxu0 0.0
      %552 = vmatpush1.msra.mxu0 0.0
      %553 = vmatprep.subr.mxu0 0.0
      %554 = vmatpush1.msra.mxu0 0.0
      %555 = vmatprep.subr.mxu0 0.0
      %556 = vmatpush1.msra.mxu0 0.0
      %557 = vmatprep.subr.mxu0 0.0
      %558 = vmatpush1.msra.mxu0 0.0
      %559 = vmatprep.subr.mxu0 0.0
      %560 = vmatpush1.msra.mxu0 0.0
      %561 = vmatprep.subr.mxu0 0.0
      %562 = vmatpush1.msra.mxu0 0.0
      %563 = vmatprep.subr.mxu0 0.0
      %564 = vmatpush1.msra.mxu0 0.0
      %565 = vmatprep.subr.mxu0 0.0
      %566 = vmatpush1.msra.mxu0 0.0
      %567 = vmatprep.subr.mxu0 0.0
      %568 = vmatpush1.msra.mxu0 0.0
      %569 = vmatprep.subr.mxu0 0.0
      %570 = vmatpush1.msra.mxu0 0.0
      %571 = vmatprep.subr.mxu0 0.0
      %572 = vmatpush1.msra.mxu0 0.0
      %573 = vmatprep.subr.mxu0 0.0
      %574 = vmatpush1.msra.mxu0 0.0
      %575 = vmatprep.subr.mxu0 0.0
      %576 = vmatpush1.msra.mxu0 0.0
      %577 = vmatprep.subr.mxu0 0.0
      %578 = vmatpush1.msra.mxu0 0.0
      %579 = vmatprep.subr.mxu0 0.0
      %580 = vmatpush1.msra.mxu0 0.0
      %581 = vmatprep.subr.mxu0 0.0
      %582 = vmatpush1.msra.mxu0 0.0
      %583 = vmatprep.subr.mxu0 0.0
      %584 = vmatpush1.msra.mxu0 0.0
      %585 = vmatprep.subr.mxu0 0.0
      %586 = vmatpush1.msra.mxu0 0.0
      %587 = vmatprep.subr.mxu0 0.0
      %588 = vmatpush1.msra.mxu0 0.0
      %589 = vmatprep.subr.mxu0 0.0
      %590 = vmatpush1.msra.mxu0 0.0
      %591 = vmatprep.subr.mxu0 0.0
      %592 = vmatpush1.msra.mxu0 0.0
      %593 = vmatprep.subr.mxu0 0.0
      %594 = vmatpush1.msra.mxu0 0.0
      %595 = vmatprep.subr.mxu0 0.0
      %596 = vmatpush1.msra.mxu0 0.0
      %597 = vmatprep.subr.mxu0 0.0
      %598 = vmatpush1.msra.mxu0 0.0
      %599 = vmatprep.mubr.f32.mxu0 0.0
      %600 = vmatmul.mubr.f32.gmra.mrb[0].mxu0 %v533
      %v601 = vpop.f32.mrb[0].mxu0
      %v602 = vadd.f32 0.0, %v601
      %v603 = vpop.f32.mrb[0].mxu0
      %604 = vdwg.mxu0
      %s605 = scalar_lea.vmem %s191, 12
      %v606 = vld [vmem:[%s605] sm:$0xf]
      %v608 = vsel %vm381, %v606, 0
      %610 = vmatprep.subr.mxu0 0.0
      %611 = vmatpush1.msra.mxu0 %v376
      %612 = vmatprep.subr.mxu0 0.0
      %613 = vmatpush1.msra.mxu0 %v377
      %614 = vmatprep.subr.mxu0 0.0
      %615 = vmatpush1.msra.mxu0 %v378
      %616 = vmatprep.subr.mxu0 0.0
      %617 = vmatpush1.msra.mxu0 %v379
      %618 = vmatprep.subr.mxu0 0.0
      %619 = vmatpush1.msra.mxu0 0.0
      %620 = vmatprep.subr.mxu0 0.0
      %621 = vmatpush1.msra.mxu0 0.0
      %622 = vmatprep.subr.mxu0 0.0
      %623 = vmatpush1.msra.mxu0 0.0
      %624 = vmatprep.subr.mxu0 0.0
      %625 = vmatpush1.msra.mxu0 0.0
      %626 = vmatprep.subr.mxu0 0.0
      %627 = vmatpush1.msra.mxu0 0.0
      %628 = vmatprep.subr.mxu0 0.0
      %629 = vmatpush1.msra.mxu0 0.0
      %630 = vmatprep.subr.mxu0 0.0
      %631 = vmatpush1.msra.mxu0 0.0
      %632 = vmatprep.subr.mxu0 0.0
      %633 = vmatpush1.msra.mxu0 0.0
      %634 = vmatprep.subr.mxu0 0.0
      %635 = vmatpush1.msra.mxu0 0.0
      %636 = vmatprep.subr.mxu0 0.0
      %637 = vmatpush1.msra.mxu0 0.0
      %638 = vmatprep.subr.mxu0 0.0
      %639 = vmatpush1.msra.mxu0 0.0
      %640 = vmatprep.subr.mxu0 0.0
      %641 = vmatpush1.msra.mxu0 0.0
      %642 = vmatprep.subr.mxu0 0.0
      %643 = vmatpush1.msra.mxu0 0.0
      %644 = vmatprep.subr.mxu0 0.0
      %645 = vmatpush1.msra.mxu0 0.0
      %646 = vmatprep.subr.mxu0 0.0
      %647 = vmatpush1.msra.mxu0 0.0
      %648 = vmatprep.subr.mxu0 0.0
      %649 = vmatpush1.msra.mxu0 0.0
      %650 = vmatprep.subr.mxu0 0.0
      %651 = vmatpush1.msra.mxu0 0.0
      %652 = vmatprep.subr.mxu0 0.0
      %653 = vmatpush1.msra.mxu0 0.0
      %654 = vmatprep.subr.mxu0 0.0
      %655 = vmatpush1.msra.mxu0 0.0
      %656 = vmatprep.subr.mxu0 0.0
      %657 = vmatpush1.msra.mxu0 0.0
      %658 = vmatprep.subr.mxu0 0.0
      %659 = vmatpush1.msra.mxu0 0.0
      %660 = vmatprep.subr.mxu0 0.0
      %661 = vmatpush1.msra.mxu0 0.0
      %662 = vmatprep.subr.mxu0 0.0
      %663 = vmatpush1.msra.mxu0 0.0
      %664 = vmatprep.subr.mxu0 0.0
      %665 = vmatpush1.msra.mxu0 0.0
      %666 = vmatprep.subr.mxu0 0.0
      %667 = vmatpush1.msra.mxu0 0.0
      %668 = vmatprep.subr.mxu0 0.0
      %669 = vmatpush1.msra.mxu0 0.0
      %670 = vmatprep.subr.mxu0 0.0
      %671 = vmatpush1.msra.mxu0 0.0
      %672 = vmatprep.subr.mxu0 0.0
      %673 = vmatpush1.msra.mxu0 0.0
      %674 = vmatprep.mubr.f32.mxu0 0.0
      %675 = vmatmul.mubr.f32.gmra.mrb[0].mxu0 %v608
      %v676 = vpop.f32.mrb[0].mxu0
      %v677 = vadd.f32 0.0, %v676
      %v678 = vpop.f32.mrb[0].mxu0
      %679 = vdwg.mxu0
      %s680 = scalar_lea.vmem %s191, 16
      %v681 = vld [vmem:[%s680] sm:$0xf]
      %v683 = vsel %vm381, %v681, 0
      %685 = vmatprep.subr.mxu0 0.0
      %686 = vmatpush1.msra.mxu0 %v376
      %687 = vmatprep.subr.mxu0 0.0
      %688 = vmatpush1.msra.mxu0 %v377
      %689 = vmatprep.subr.mxu0 0.0
      %690 = vmatpush1.msra.mxu0 %v378
      %691 = vmatprep.subr.mxu0 0.0
      %692 = vmatpush1.msra.mxu0 %v379
      %693 = vmatprep.subr.mxu0 0.0
      %694 = vmatpush1.msra.mxu0 0.0
      %695 = vmatprep.subr.mxu0 0.0
      %696 = vmatpush1.msra.mxu0 0.0
      %697 = vmatprep.subr.mxu0 0.0
      %698 = vmatpush1.msra.mxu0 0.0
      %699 = vmatprep.subr.mxu0 0.0
      %700 = vmatpush1.msra.mxu0 0.0
      %701 = vmatprep.subr.mxu0 0.0
      %702 = vmatpush1.msra.mxu0 0.0
      %703 = vmatprep.subr.mxu0 0.0
      %704 = vmatpush1.msra.mxu0 0.0
      %705 = vmatprep.subr.mxu0 0.0
      %706 = vmatpush1.msra.mxu0 0.0
      %707 = vmatprep.subr.mxu0 0.0
      %708 = vmatpush1.msra.mxu0 0.0
      %709 = vmatprep.subr.mxu0 0.0
      %710 = vmatpush1.msra.mxu0 0.0
      %711 = vmatprep.subr.mxu0 0.0
      %712 = vmatpush1.msra.mxu0 0.0
      %713 = vmatprep.subr.mxu0 0.0
      %714 = vmatpush1.msra.mxu0 0.0
      %715 = vmatprep.subr.mxu0 0.0
      %716 = vmatpush1.msra.mxu0 0.0
      %717 = vmatprep.subr.mxu0 0.0
      %718 = vmatpush1.msra.mxu0 0.0
      %719 = vmatprep.subr.mxu0 0.0
      %720 = vmatpush1.msra.mxu0 0.0
      %721 = vmatprep.subr.mxu0 0.0
      %722 = vmatpush1.msra.mxu0 0.0
      %723 = vmatprep.subr.mxu0 0.0
      %724 = vmatpush1.msra.mxu0 0.0
      %725 = vmatprep.subr.mxu0 0.0
      %726 = vmatpush1.msra.mxu0 0.0
      %727 = vmatprep.subr.mxu0 0.0
      %728 = vmatpush1.msra.mxu0 0.0
      %729 = vmatprep.subr.mxu0 0.0
      %730 = vmatpush1.msra.mxu0 0.0
      %731 = vmatprep.subr.mxu0 0.0
      %732 = vmatpush1.msra.mxu0 0.0
      %733 = vmatprep.subr.mxu0 0.0
      %734 = vmatpush1.msra.mxu0 0.0
      %735 = vmatprep.subr.mxu0 0.0
      %736 = vmatpush1.msra.mxu0 0.0
      %737 = vmatprep.subr.mxu0 0.0
      %738 = vmatpush1.msra.mxu0 0.0
      %739 = vmatprep.subr.mxu0 0.0
      %740 = vmatpush1.msra.mxu0 0.0
      %741 = vmatprep.subr.mxu0 0.0
      %742 = vmatpush1.msra.mxu0 0.0
      %743 = vmatprep.subr.mxu0 0.0
      %744 = vmatpush1.msra.mxu0 0.0
      %745 = vmatprep.subr.mxu0 0.0
      %746 = vmatpush1.msra.mxu0 0.0
      %747 = vmatprep.subr.mxu0 0.0
      %748 = vmatpush1.msra.mxu0 0.0
      %749 = vmatprep.mubr.f32.mxu0 0.0
      %750 = vmatmul.mubr.f32.gmra.mrb[0].mxu0 %v683
      %v751 = vpop.f32.mrb[0].mxu0
      %v752 = vadd.f32 0.0, %v751
      %v753 = vpop.f32.mrb[0].mxu0
      %754 = vdwg.mxu0
      %s755 = scalar_lea.vmem %s191, 20
      %v756 = vld [vmem:[%s755] sm:$0xf]
      %v758 = vsel %vm381, %v756, 0
      %760 = vmatprep.subr.mxu0 0.0
      %761 = vmatpush1.msra.mxu0 %v376
      %762 = vmatprep.subr.mxu0 0.0
      %763 = vmatpush1.msra.mxu0 %v377
      %764 = vmatprep.subr.mxu0 0.0
      %765 = vmatpush1.msra.mxu0 %v378
      %766 = vmatprep.subr.mxu0 0.0
      %767 = vmatpush1.msra.mxu0 %v379
      %768 = vmatprep.subr.mxu0 0.0
      %769 = vmatpush1.msra.mxu0 0.0
      %770 = vmatprep.subr.mxu0 0.0
      %771 = vmatpush1.msra.mxu0 0.0
      %772 = vmatprep.subr.mxu0 0.0
      %773 = vmatpush1.msra.mxu0 0.0
      %774 = vmatprep.subr.mxu0 0.0
      %775 = vmatpush1.msra.mxu0 0.0
      %776 = vmatprep.subr.mxu0 0.0
      %777 = vmatpush1.msra.mxu0 0.0
      %778 = vmatprep.subr.mxu0 0.0
      %779 = vmatpush1.msra.mxu0 0.0
      %780 = vmatprep.subr.mxu0 0.0
      %781 = vmatpush1.msra.mxu0 0.0
      %782 = vmatprep.subr.mxu0 0.0
      %783 = vmatpush1.msra.mxu0 0.0
      %784 = vmatprep.subr.mxu0 0.0
      %785 = vmatpush1.msra.mxu0 0.0
      %786 = vmatprep.subr.mxu0 0.0
      %787 = vmatpush1.msra.mxu0 0.0
      %788 = vmatprep.subr.mxu0 0.0
      %789 = vmatpush1.msra.mxu0 0.0
      %790 = vmatprep.subr.mxu0 0.0
      %791 = vmatpush1.msra.mxu0 0.0
      %792 = vmatprep.subr.mxu0 0.0
      %793 = vmatpush1.msra.mxu0 0.0
      %794 = vmatprep.subr.mxu0 0.0
      %795 = vmatpush1.msra.mxu0 0.0
      %796 = vmatprep.subr.mxu0 0.0
      %797 = vmatpush1.msra.mxu0 0.0
      %798 = vmatprep.subr.mxu0 0.0
      %799 = vmatpush1.msra.mxu0 0.0
      %800 = vmatprep.subr.mxu0 0.0
      %801 = vmatpush1.msra.mxu0 0.0
      %802 = vmatprep.subr.mxu0 0.0
      %803 = vmatpush1.msra.mxu0 0.0
      %804 = vmatprep.subr.mxu0 0.0
      %805 = vmatpush1.msra.mxu0 0.0
      %806 = vmatprep.subr.mxu0 0.0
      %807 = vmatpush1.msra.mxu0 0.0
      %808 = vmatprep.subr.mxu0 0.0
      %809 = vmatpush1.msra.mxu0 0.0
      %810 = vmatprep.subr.mxu0 0.0
      %811 = vmatpush1.msra.mxu0 0.0
      %812 = vmatprep.subr.mxu0 0.0
      %813 = vmatpush1.msra.mxu0 0.0
      %814 = vmatprep.subr.mxu0 0.0
      %815 = vmatpush1.msra.mxu0 0.0
      %816 = vmatprep.subr.mxu0 0.0
      %817 = vmatpush1.msra.mxu0 0.0
      %818 = vmatprep.subr.mxu0 0.0
      %819 = vmatpush1.msra.mxu0 0.0
      %820 = vmatprep.subr.mxu0 0.0
      %821 = vmatpush1.msra.mxu0 0.0
      %822 = vmatprep.subr.mxu0 0.0
      %823 = vmatpush1.msra.mxu0 0.0
      %824 = vmatprep.mubr.f32.mxu0 0.0
      %825 = vmatmul.mubr.f32.gmra.mrb[0].mxu0 %v758
      %v826 = vpop.f32.mrb[0].mxu0
      %v827 = vadd.f32 0.0, %v826
      %v828 = vpop.f32.mrb[0].mxu0
      %829 = vdwg.mxu0
      %s830 = scalar_lea.vmem %s191, 24
      %v831 = vld [vmem:[%s830] sm:$0xf]
      %v833 = vsel %vm381, %v831, 0
      %835 = vmatprep.subr.mxu0 0.0
      %836 = vmatpush1.msra.mxu0 %v376
      %837 = vmatprep.subr.mxu0 0.0
      %838 = vmatpush1.msra.mxu0 %v377
      %839 = vmatprep.subr.mxu0 0.0
      %840 = vmatpush1.msra.mxu0 %v378
      %841 = vmatprep.subr.mxu0 0.0
      %842 = vmatpush1.msra.mxu0 %v379
      %843 = vmatprep.subr.mxu0 0.0
      %844 = vmatpush1.msra.mxu0 0.0
      %845 = vmatprep.subr.mxu0 0.0
      %846 = vmatpush1.msra.mxu0 0.0
      %847 = vmatprep.subr.mxu0 0.0
      %848 = vmatpush1.msra.mxu0 0.0
      %849 = vmatprep.subr.mxu0 0.0
      %850 = vmatpush1.msra.mxu0 0.0
      %851 = vmatprep.subr.mxu0 0.0
      %852 = vmatpush1.msra.mxu0 0.0
      %853 = vmatprep.subr.mxu0 0.0
      %854 = vmatpush1.msra.mxu0 0.0
      %855 = vmatprep.subr.mxu0 0.0
      %856 = vmatpush1.msra.mxu0 0.0
      %857 = vmatprep.subr.mxu0 0.0
      %858 = vmatpush1.msra.mxu0 0.0
      %859 = vmatprep.subr.mxu0 0.0
      %860 = vmatpush1.msra.mxu0 0.0
      %861 = vmatprep.subr.mxu0 0.0
      %862 = vmatpush1.msra.mxu0 0.0
      %863 = vmatprep.subr.mxu0 0.0
      %864 = vmatpush1.msra.mxu0 0.0
      %865 = vmatprep.subr.mxu0 0.0
      %866 = vmatpush1.msra.mxu0 0.0
      %867 = vmatprep.subr.mxu0 0.0
      %868 = vmatpush1.msra.mxu0 0.0
      %869 = vmatprep.subr.mxu0 0.0
      %870 = vmatpush1.msra.mxu0 0.0
      %871 = vmatprep.subr.mxu0 0.0
      %872 = vmatpush1.msra.mxu0 0.0
      %873 = vmatprep.subr.mxu0 0.0
      %874 = vmatpush1.msra.mxu0 0.0
      %875 = vmatprep.subr.mxu0 0.0
      %876 = vmatpush1.msra.mxu0 0.0
      %877 = vmatprep.subr.mxu0 0.0
      %878 = vmatpush1.msra.mxu0 0.0
      %879 = vmatprep.subr.mxu0 0.0
      %880 = vmatpush1.msra.mxu0 0.0
      %881 = vmatprep.subr.mxu0 0.0
      %882 = vmatpush1.msra.mxu0 0.0
      %883 = vmatprep.subr.mxu0 0.0
      %884 = vmatpush1.msra.mxu0 0.0
      %885 = vmatprep.subr.mxu0 0.0
      %886 = vmatpush1.msra.mxu0 0.0
      %887 = vmatprep.subr.mxu0 0.0
      %888 = vmatpush1.msra.mxu0 0.0
      %889 = vmatprep.subr.mxu0 0.0
      %890 = vmatpush1.msra.mxu0 0.0
      %891 = vmatprep.subr.mxu0 0.0
      %892 = vmatpush1.msra.mxu0 0.0
      %893 = vmatprep.subr.mxu0 0.0
      %894 = vmatpush1.msra.mxu0 0.0
      %895 = vmatprep.subr.mxu0 0.0
      %896 = vmatpush1.msra.mxu0 0.0
      %897 = vmatprep.subr.mxu0 0.0
      %898 = vmatpush1.msra.mxu0 0.0
      %899 = vmatprep.mubr.f32.mxu0 0.0
      %900 = vmatmul.mubr.f32.gmra.mrb[0].mxu0 %v833
      %v901 = vpop.f32.mrb[0].mxu0
      %v902 = vadd.f32 0.0, %v901
      %v903 = vpop.f32.mrb[0].mxu0
      %904 = vdwg.mxu0
      %s905 = scalar_lea.vmem %s191, 28
      %v906 = vld [vmem:[%s905] sm:$0xf]
      %v908 = vsel %vm381, %v906, 0
      %910 = vmatprep.subr.mxu0 0.0
      %911 = vmatpush1.msra.mxu0 %v376
      %912 = vmatprep.subr.mxu0 0.0
      %913 = vmatpush1.msra.mxu0 %v377
      %914 = vmatprep.subr.mxu0 0.0
      %915 = vmatpush1.msra.mxu0 %v378
      %916 = vmatprep.subr.mxu0 0.0
      %917 = vmatpush1.msra.mxu0 %v379
      %918 = vmatprep.subr.mxu0 0.0
      %919 = vmatpush1.msra.mxu0 0.0
      %920 = vmatprep.subr.mxu0 0.0
      %921 = vmatpush1.msra.mxu0 0.0
      %922 = vmatprep.subr.mxu0 0.0
      %923 = vmatpush1.msra.mxu0 0.0
      %924 = vmatprep.subr.mxu0 0.0
      %925 = vmatpush1.msra.mxu0 0.0
      %926 = vmatprep.subr.mxu0 0.0
      %927 = vmatpush1.msra.mxu0 0.0
      %928 = vmatprep.subr.mxu0 0.0
      %929 = vmatpush1.msra.mxu0 0.0
      %930 = vmatprep.subr.mxu0 0.0
      %931 = vmatpush1.msra.mxu0 0.0
      %932 = vmatprep.subr.mxu0 0.0
      %933 = vmatpush1.msra.mxu0 0.0
      %934 = vmatprep.subr.mxu0 0.0
      %935 = vmatpush1.msra.mxu0 0.0
      %936 = vmatprep.subr.mxu0 0.0
      %937 = vmatpush1.msra.mxu0 0.0
      %938 = vmatprep.subr.mxu0 0.0
      %939 = vmatpush1.msra.mxu0 0.0
      %940 = vmatprep.subr.mxu0 0.0
      %941 = vmatpush1.msra.mxu0 0.0
      %942 = vmatprep.subr.mxu0 0.0
      %943 = vmatpush1.msra.mxu0 0.0
      %944 = vmatprep.subr.mxu0 0.0
      %945 = vmatpush1.msra.mxu0 0.0
      %946 = vmatprep.subr.mxu0 0.0
      %947 = vmatpush1.msra.mxu0 0.0
      %948 = vmatprep.subr.mxu0 0.0
      %949 = vmatpush1.msra.mxu0 0.0
      %950 = vmatprep.subr.mxu0 0.0
      %951 = vmatpush1.msra.mxu0 0.0
      %952 = vmatprep.subr.mxu0 0.0
      %953 = vmatpush1.msra.mxu0 0.0
      %954 = vmatprep.subr.mxu0 0.0
      %955 = vmatpush1.msra.mxu0 0.0
      %956 = vmatprep.subr.mxu0 0.0
      %957 = vmatpush1.msra.mxu0 0.0
      %958 = vmatprep.subr.mxu0 0.0
      %959 = vmatpush1.msra.mxu0 0.0
      %960 = vmatprep.subr.mxu0 0.0
      %961 = vmatpush1.msra.mxu0 0.0
      %962 = vmatprep.subr.mxu0 0.0
      %963 = vmatpush1.msra.mxu0 0.0
      %964 = vmatprep.subr.mxu0 0.0
      %965 = vmatpush1.msra.mxu0 0.0
      %966 = vmatprep.subr.mxu0 0.0
      %967 = vmatpush1.msra.mxu0 0.0
      %968 = vmatprep.subr.mxu0 0.0
      %969 = vmatpush1.msra.mxu0 0.0
      %970 = vmatprep.subr.mxu0 0.0
      %971 = vmatpush1.msra.mxu0 0.0
      %972 = vmatprep.subr.mxu0 0.0
      %973 = vmatpush1.msra.mxu0 0.0
      %974 = vmatprep.mubr.f32.mxu0 0.0
      %975 = vmatmul.mubr.f32.gmra.mrb[0].mxu0 %v908
      %v976 = vpop.f32.mrb[0].mxu0
      %v977 = vadd.f32 0.0, %v976
      %v978 = vpop.f32.mrb[0].mxu0
      %979 = vdwg.mxu0
      %981 = vrot.lane.b32.xlu0 %v527, 16
      %v982 = vpop.permute.xlu0 %981
      %985 = vrot.lane.b32.xlu0 %v602, 32
      %v986 = vpop.permute.xlu0 %985
      %989 = vrot.lane.b32.xlu0 %v677, 48
      %v990 = vpop.permute.xlu0 %989
      %993 = vrot.lane.b32.xlu0 %v752, 64
      %v994 = vpop.permute.xlu0 %993
      %997 = vrot.lane.b32.xlu0 %v827, 80
      %v998 = vpop.permute.xlu0 %997
      %1001 = vrot.lane.b32.xlu0 %v902, 96
      %v1002 = vpop.permute.xlu0 %1001
      %1005 = vrot.lane.b32.xlu0 %v977, 112
      %v1006 = vpop.permute.xlu0 %1005
      %vm1008 = vcmask 130048
      %v1009 = vsel %vm1008, %v452, %v982
      %v1010 = vsel %vm381, %v1009, %v986
      %vm1011 = vcmask 392192
      %v1012 = vsel %vm1011, %v1010, %v990
      %vm1013 = vcmask 523264
      %v1014 = vsel %vm1013, %v1012, %v994
      %vm1015 = vcmask 654336
      %v1016 = vsel %vm1015, %v1014, %v998
      %vm1017 = vcmask 785408
      %v1018 = vsel %vm1017, %v1016, %v1002
      %vm1019 = vcmask 916480
      %v1020 = vsel %vm1019, %v1018, %v1006
      %1021 = vst [vmem:[%s195] sm:$0xf] %v1020
      %p1022 = scmp.lt.s32.totalorder %s15, 1
      %s1023 = scalar_select %p1022, %s15, 1
      %s1024 = smul.addr %s1023, 4
      %s1025 = scalar_lea.vmem %s4, %s1024
      // Predicated region
      $region41: #{pem_forward.2} parent=35 // pred_check
        %p1026 = pneg %p122
      $region42: #{pem_forward.2} parent=35 // pred_check_branch
        %1028 = sbr.rel (%p1026) target = $region44
      $region43: #{pem_forward.2} parent=35 // pred_region
        _
      $region44: #{pem_forward.2} parent=35 // pred_fallthru
        _
    $region36: #{pem_forward.2} parent=5 // pred_fallthru
      _
    %p1029 = scmp.le.s32.totalorder 2, %s10
    // Predicated region
    $region45: #{pem_forward.2} parent=5 // pred_check
      %p1030 = pneg %p1029
    $region46: #{pem_forward.2} parent=5 // pred_check_branch
      %1032 = sbr.rel (%p1030) target = $region48
    $region47: #{pem_forward.2} parent=5 // pred_region
      %s1033 = ssub.s32 %s10, 2
      // Predicated region
      $region49: #{pem_forward.2} parent=47 // pred_check
        %p1034 = pneg %p128
      $region50: #{pem_forward.2} parent=47 // pred_check_branch
        %1036 = sbr.rel (%p1034) target = $region52
      $region51: #{pem_forward.2} parent=47 // pred_region
        %p1037 = scmp.lt.s32.totalorder %s16, 1
        %s1038 = scalar_select %p1037, %s16, 1
        %s1039 = smul.addr %s1038, 4
        %s1040 = scalar_lea.vmem %s4, %s1039
      $region52: #{pem_forward.2} parent=47 // pred_fallthru
        _
    $region48: #{pem_forward.2} parent=5 // pred_fallthru
      _
  $region6: #{pem_forward.2} parent=0 // loop_footer
    %s14 = sadd.s32 1, %s10
  $region7: #{pem_forward.2} parent=0 // loop_footer_branch
    %9 = sbr.rel target = $region3
  $region8: #{pem_forward.2} parent=0 // loop_exit
    _

// kernel: pem_forward.3
$region0: #{pem_forward.3}
  #allocation0 [shape = 'u32[]', space=smem, size = 0x4, offset = 0x4, fixed_abs, tag = 'smem constant byte address 0x4 - core index']
  #allocation1 [shape = 'u32[144,128]{1,0:T(1,128)}', space=vmem, size = 0x12000, scoped, tag = 'internal scratch']
  %s0 = inlined_call_operand.vmem [shape: f32[8,128], index: 0, kind: input, shape index: {}]
  %s1 = inlined_call_operand.vmem [shape: f32[128,64], index: 1, kind: input, shape index: {}]
  %s2 = inlined_call_operand.vmem [shape: f32[1,64], index: 2, kind: input, shape index: {}]
  %s3 = inlined_call_operand.vmem [shape: f32[64,128], index: 3, kind: input, shape index: {}]
  %s4 = inlined_call_operand.vmem [shape: f32[1,128], index: 4, kind: input, shape index: {}]
  %s5 = inlined_call_operand.vmem [shape: f32[192,160], index: 5, kind: input, shape index: {}]
  %s6 = inlined_call_operand.vmem [shape: f32[1,160], index: 6, kind: input, shape index: {}]
  %s7 = inlined_call_operand.vmem [shape: f32[160,160], index: 7, kind: input, shape index: {}]
  %s8 = inlined_call_operand.vmem [shape: f32[1,160], index: 8, kind: input, shape index: {}]
  %s9 = inlined_call_operand.vmem [shape: f32[160,160], index: 9, kind: input, shape index: {}]
  %s10 = inlined_call_operand.vmem [shape: f32[1,160], index: 10, kind: input, shape index: {}]
  %s11 = inlined_call_operand.vmem [shape: f32[160,8], index: 11, kind: input, shape index: {}]
  %s12 = inlined_call_operand.vmem [shape: f32[1,8], index: 12, kind: input, shape index: {}]
  %s13 = inlined_call_operand.vmem [shape: f32[8,8], index: 13, kind: output, shape index: {}]
  %s14 = sld [smem:[#allocation0]]
  $region62: #{pem_forward.3} parent=0
    _
  %s16 = ssub.s32 1, %s14
  %s17 = scalar_select 0, %s16, %s14
  // Predicated region
  $region2: #{pem_forward.3} parent=0 // pred_check
    _
  $region3: #{pem_forward.3} parent=0 // pred_check_branch
    %19 = sbr.rel (0) target = $region5
  $region4: #{pem_forward.3} parent=0 // pred_region
    _
  $region5: #{pem_forward.3} parent=0 // pred_fallthru
    _
  // Predicated region
  $region6: #{pem_forward.3} parent=0 // pred_check
    _
  $region7: #{pem_forward.3} parent=0 // pred_check_branch
    %21 = sbr.rel (0) target = $region9
  $region8: #{pem_forward.3} parent=0 // pred_region
    _
  $region9: #{pem_forward.3} parent=0 // pred_fallthru
    _
  // Predicated region
  $region10: #{pem_forward.3} parent=0 // pred_check
    _
  $region11: #{pem_forward.3} parent=0 // pred_check_branch
    %23 = sbr.rel (0) target = $region13
  $region12: #{pem_forward.3} parent=0 // pred_region
    _
  $region13: #{pem_forward.3} parent=0 // pred_fallthru
    _
  // Predicated region
  $region14: #{pem_forward.3} parent=0 // pred_check
    _
  $region15: #{pem_forward.3} parent=0 // pred_check_branch
    %25 = sbr.rel (0) target = $region17
  $region16: #{pem_forward.3} parent=0 // pred_region
    _
  $region17: #{pem_forward.3} parent=0 // pred_fallthru
    _
  // Predicated region
  $region18: #{pem_forward.3} parent=0 // pred_check
    _
  $region19: #{pem_forward.3} parent=0 // pred_check_branch
    %27 = sbr.rel (0) target = $region21
  $region20: #{pem_forward.3} parent=0 // pred_region
    _
  $region21: #{pem_forward.3} parent=0 // pred_fallthru
    _
  // Predicated region
  $region22: #{pem_forward.3} parent=0 // pred_check
    _
  $region23: #{pem_forward.3} parent=0 // pred_check_branch
    %29 = sbr.rel (0) target = $region25
  $region24: #{pem_forward.3} parent=0 // pred_region
    _
  $region25: #{pem_forward.3} parent=0 // pred_fallthru
    _
  // Predicated region
  $region26: #{pem_forward.3} parent=0 // pred_check
    _
  $region27: #{pem_forward.3} parent=0 // pred_check_branch
    %31 = sbr.rel (0) target = $region29
  $region28: #{pem_forward.3} parent=0 // pred_region
    _
  $region29: #{pem_forward.3} parent=0 // pred_fallthru
    _
  // Predicated region
  $region30: #{pem_forward.3} parent=0 // pred_check
    _
  $region31: #{pem_forward.3} parent=0 // pred_check_branch
    %33 = sbr.rel (0) target = $region33
  $region32: #{pem_forward.3} parent=0 // pred_region
    _
  $region33: #{pem_forward.3} parent=0 // pred_fallthru
    _
  // Predicated region
  $region34: #{pem_forward.3} parent=0 // pred_check
    _
  $region35: #{pem_forward.3} parent=0 // pred_check_branch
    %35 = sbr.rel (0) target = $region37
  $region36: #{pem_forward.3} parent=0 // pred_region
    _
  $region37: #{pem_forward.3} parent=0 // pred_fallthru
    _
  // Predicated region
  $region38: #{pem_forward.3} parent=0 // pred_check
    _
  $region39: #{pem_forward.3} parent=0 // pred_check_branch
    %37 = sbr.rel (0) target = $region41
  $region40: #{pem_forward.3} parent=0 // pred_region
    _
  $region41: #{pem_forward.3} parent=0 // pred_fallthru
    _
  // Predicated region
  $region42: #{pem_forward.3} parent=0 // pred_check
    _
  $region43: #{pem_forward.3} parent=0 // pred_check_branch
    %39 = sbr.rel (0) target = $region45
  $region44: #{pem_forward.3} parent=0 // pred_region
    _
  $region45: #{pem_forward.3} parent=0 // pred_fallthru
    _
  // Predicated region
  $region46: #{pem_forward.3} parent=0 // pred_check
    _
  $region47: #{pem_forward.3} parent=0 // pred_check_branch
    %41 = sbr.rel (0) target = $region49
  $region48: #{pem_forward.3} parent=0 // pred_region
    _
  $region49: #{pem_forward.3} parent=0 // pred_fallthru
    _
  // Predicated region
  $region50: #{pem_forward.3} parent=0 // pred_check
    _
  $region51: #{pem_forward.3} parent=0 // pred_check_branch
    %43 = sbr.rel (0) target = $region53
  $region52: #{pem_forward.3} parent=0 // pred_region
    _
  $region53: #{pem_forward.3} parent=0 // pred_fallthru
    _
  %v44 = vld [vmem:[%s0] sm:$0xff]
  %v45 = vld [vmem:[%s1] sm:$0xff]
  %v46 = vld [vmem:[%s1 + $0x8] sm:$0xff]
  %v47 = vld [vmem:[%s1 + $0x10] sm:$0xff]
  %v48 = vld [vmem:[%s1 + $0x18] sm:$0xff]
  %v49 = vld [vmem:[%s1 + $0x20] sm:$0xff]
  %v50 = vld [vmem:[%s1 + $0x28] sm:$0xff]
  %v51 = vld [vmem:[%s1 + $0x30] sm:$0xff]
  %v52 = vld [vmem:[%s1 + $0x38] sm:$0xff]
  %v53 = vld [vmem:[%s1 + $0x40] sm:$0xff]
  %v54 = vld [vmem:[%s1 + $0x48] sm:$0xff]
  %v55 = vld [vmem:[%s1 + $0x50] sm:$0xff]
  %v56 = vld [vmem:[%s1 + $0x58] sm:$0xff]
  %v57 = vld [vmem:[%s1 + $0x60] sm:$0xff]
  %v58 = vld [vmem:[%s1 + $0x68] sm:$0xff]
  %v59 = vld [vmem:[%s1 + $0x70] sm:$0xff]
  %v60 = vld [vmem:[%s1 + $0x78] sm:$0xff]
  %v61 = vld [vmem:[%s2] sm:$0x1]
  %v63 = vlaneseq
  %v64 = vshrl.u32 %v63, 7
  %v65 = vsub.s32 0, %v64
  %v66 = vrot.slane %v61, %v65
  %68 = vmatprep.subr.mxu0 0.0
  %69 = vmatpush1.msra.mxu0 %v45
  %70 = vmatprep.subr.mxu0 0.0
  %71 = vmatpush1.msra.mxu0 %v46
  %72 = vmatprep.subr.mxu0 0.0
  %73 = vmatpush1.msra.mxu0 %v47
  %74 = vmatprep.subr.mxu0 0.0
  %75 = vmatpush1.msra.mxu0 %v48
  %76 = vmatprep.subr.mxu0 0.0
  %77 = vmatpush1.msra.mxu0 %v49
  %78 = vmatprep.subr.mxu0 0.0
  %79 = vmatpush1.msra.mxu0 %v50
  %80 = vmatprep.subr.mxu0 0.0
  %81 = vmatpush1.msra.mxu0 %v51
  %82 = vmatprep.subr.mxu0 0.0
  %83 = vmatpush1.msra.mxu0 %v52
  %84 = vmatprep.subr.mxu0 0.0
  %85 = vmatpush1.msra.mxu0 %v53
  %86 = vmatprep.subr.mxu0 0.0
  %87 = vmatpush1.msra.mxu0 %v54
  %88 = vmatprep.subr.mxu0 0.0
  %89 = vmatpush1.msra.mxu0 %v55
  %90 = vmatprep.subr.mxu0 0.0
  %91 = vmatpush1.msra.mxu0 %v56
  %92 = vmatprep.subr.mxu0 0.0
  %93 = vmatpush1.msra.mxu0 %v57
  %94 = vmatprep.subr.mxu0 0.0
  %95 = vmatpush1.msra.mxu0 %v58
  %96 = vmatprep.subr.mxu0 0.0
  %97 = vmatpush1.msra.mxu0 %v59
  %98 = vmatprep.subr.mxu0 0.0
  %99 = vmatpush1.msra.mxu0 %v60
  %100 = vmatprep.subr.mxu0 0.0
  %101 = vmatpush1.msra.mxu0 0.0
  %102 = vmatprep.subr.mxu0 0.0
  %103 = vmatpush1.msra.mxu0 0.0
  %104 = vmatprep.subr.mxu0 0.0
  %105 = vmatpush1.msra.mxu0 0.0
  %106 = vmatprep.subr.mxu0 0.0
  %107 = vmatpush1.msra.mxu0 0.0
  %108 = vmatprep.subr.mxu0 0.0
  %109 = vmatpush1.msra.mxu0 0.0
  %110 = vmatprep.subr.mxu0 0.0
  %111 = vmatpush1.msra.mxu0 0.0
  %112 = vmatprep.subr.mxu0 0.0
  %113 = vmatpush1.msra.mxu0 0.0
  %114 = vmatprep.subr.mxu0 0.0
  %115 = vmatpush1.msra.mxu0 0.0
  %116 = vmatprep.subr.mxu0 0.0
  %117 = vmatpush1.msra.mxu0 0.0
  %118 = vmatprep.subr.mxu0 0.0
  %119 = vmatpush1.msra.mxu0 0.0
  %120 = vmatprep.subr.mxu0 0.0
  %121 = vmatpush1.msra.mxu0 0.0
  %122 = vmatprep.subr.mxu0 0.0
  %123 = vmatpush1.msra.mxu0 0.0
  %124 = vmatprep.subr.mxu0 0.0
  %125 = vmatpush1.msra.mxu0 0.0
  %126 = vmatprep.subr.mxu0 0.0
  %127 = vmatpush1.msra.mxu0 0.0
  %128 = vmatprep.subr.mxu0 0.0
  %129 = vmatpush1.msra.mxu0 0.0
  %130 = vmatprep.subr.mxu0 0.0
  %131 = vmatpush1.msra.mxu0 0.0
  %132 = vmatprep.mubr.f32.mxu0 0.0
  %133 = vmatmul.mubr.f32.gmra.mrb[0].mxu0 %v44
  %v134 = vpop.f32.mrb[0].mxu0
  %v135 = vadd.f32 %v66, %v134
  %v136 = vpop.f32.mrb[0].mxu0
  %137 = vdwg.mxu0
  %v138 = vmax.f32 %v135, 0.0
  %140 = vrot.lane.b32.xlu0 %v44, 64
  %v141 = vpop.permute.xlu0 %140
  %vm143 = vcmask 261120
  %v144 = vsel %vm143, %v44, %v141
  %v145 = vld [vmem:[%s3] sm:$0xff]
  %v146 = vld [vmem:[%s3 + $0x8] sm:$0xff]
  %v147 = vld [vmem:[%s3 + $0x10] sm:$0xff]
  %v148 = vld [vmem:[%s3 + $0x18] sm:$0xff]
  %v149 = vld [vmem:[%s3 + $0x20] sm:$0xff]
  %v150 = vld [vmem:[%s3 + $0x28] sm:$0xff]
  %v151 = vld [vmem:[%s3 + $0x30] sm:$0xff]
  %v152 = vld [vmem:[%s3 + $0x38] sm:$0xff]
  %v153 = vld [vmem:[%s4] sm:$0x1]
  %v155 = vlaneseq
  %v156 = vshrl.u32 %v155, 7
  %v157 = vsub.s32 0, %v156
  %v158 = vrot.slane %v153, %v157
  %vm160 = vcmask 523264
  %v162 = vsel %vm160, %v144, 0
  %164 = vmatprep.subr.mxu0 0.0
  %165 = vmatpush1.msra.mxu0 %v145
  %166 = vmatprep.subr.mxu0 0.0
  %167 = vmatpush1.msra.mxu0 %v146
  %168 = vmatprep.subr.mxu0 0.0
  %169 = vmatpush1.msra.mxu0 %v147
  %170 = vmatprep.subr.mxu0 0.0
  %171 = vmatpush1.msra.mxu0 %v148
  %172 = vmatprep.subr.mxu0 0.0
  %173 = vmatpush1.msra.mxu0 %v149
  %174 = vmatprep.subr.mxu0 0.0
  %175 = vmatpush1.msra.mxu0 %v150
  %176 = vmatprep.subr.mxu0 0.0
  %177 = vmatpush1.msra.mxu0 %v151
  %178 = vmatprep.subr.mxu0 0.0
  %179 = vmatpush1.msra.mxu0 %v152
  %180 = vmatprep.subr.mxu0 0.0
  %181 = vmatpush1.msra.mxu0 0.0
  %182 = vmatprep.subr.mxu0 0.0
  %183 = vmatpush1.msra.mxu0 0.0
  %184 = vmatprep.subr.mxu0 0.0
  %185 = vmatpush1.msra.mxu0 0.0
  %186 = vmatprep.subr.mxu0 0.0
  %187 = vmatpush1.msra.mxu0 0.0
  %188 = vmatprep.subr.mxu0 0.0
  %189 = vmatpush1.msra.mxu0 0.0
  %190 = vmatprep.subr.mxu0 0.0
  %191 = vmatpush1.msra.mxu0 0.0
  %192 = vmatprep.subr.mxu0 0.0
  %193 = vmatpush1.msra.mxu0 0.0
  %194 = vmatprep.subr.mxu0 0.0
  %195 = vmatpush1.msra.mxu0 0.0
  %196 = vmatprep.subr.mxu0 0.0
  %197 = vmatpush1.msra.mxu0 0.0
  %198 = vmatprep.subr.mxu0 0.0
  %199 = vmatpush1.msra.mxu0 0.0
  %200 = vmatprep.subr.mxu0 0.0
  %201 = vmatpush1.msra.mxu0 0.0
  %202 = vmatprep.subr.mxu0 0.0
  %203 = vmatpush1.msra.mxu0 0.0
  %204 = vmatprep.subr.mxu0 0.0
  %205 = vmatpush1.msra.mxu0 0.0
  %206 = vmatprep.subr.mxu0 0.0
  %207 = vmatpush1.msra.mxu0 0.0
  %208 = vmatprep.subr.mxu0 0.0
  %209 = vmatpush1.msra.mxu0 0.0
  %210 = vmatprep.subr.mxu0 0.0
  %211 = vmatpush1.msra.mxu0 0.0
  %212 = vmatprep.subr.mxu0 0.0
  %213 = vmatpush1.msra.mxu0 0.0
  %214 = vmatprep.subr.mxu0 0.0
  %215 = vmatpush1.msra.mxu0 0.0
  %216 = vmatprep.subr.mxu0 0.0
  %217 = vmatpush1.msra.mxu0 0.0
  %218 = vmatprep.subr.mxu0 0.0
  %219 = vmatpush1.msra.mxu0 0.0
  %220 = vmatprep.subr.mxu0 0.0
  %221 = vmatpush1.msra.mxu0 0.0
  %222 = vmatprep.subr.mxu0 0.0
  %223 = vmatpush1.msra.mxu0 0.0
  %224 = vmatprep.subr.mxu0 0.0
  %225 = vmatpush1.msra.mxu0 0.0
  %226 = vmatprep.subr.mxu0 0.0
  %227 = vmatpush1.msra.mxu0 0.0
  %228 = vmatprep.mubr.f32.mxu0 0.0
  %229 = vmatmul.mubr.f32.gmra.mrb[0].mxu0 %v162
  %v230 = vpop.f32.mrb[0].mxu0
  %v231 = vadd.f32 %v158, %v230
  %v232 = vpop.f32.mrb[0].mxu0
  %233 = vdwg.mxu0
  %v234 = vmax.f32 %v231, 0.0
  %236 = vrot.lane.b32.xlu0 %v234, 64
  %v237 = vpop.permute.xlu0 %236
  %v239 = vsel %vm160, %v138, %v237
  %v240 = vld [vmem:[%s5] sm:$0xff]
  %v241 = vld [vmem:[%s5 + $0x8] sm:$0xff]
  %v242 = vld [vmem:[%s5 + $0x10] sm:$0xff]
  %v243 = vld [vmem:[%s5 + $0x18] sm:$0xff]
  %v244 = vld [vmem:[%s5 + $0x20] sm:$0xff]
  %v245 = vld [vmem:[%s5 + $0x28] sm:$0xff]
  %v246 = vld [vmem:[%s5 + $0x30] sm:$0xff]
  %v247 = vld [vmem:[%s5 + $0x38] sm:$0xff]
  %v248 = vld [vmem:[%s5 + $0x40] sm:$0xff]
  %v249 = vld [vmem:[%s5 + $0x48] sm:$0xff]
  %v250 = vld [vmem:[%s5 + $0x50] sm:$0xff]
  %v251 = vld [vmem:[%s5 + $0x58] sm:$0xff]
  %v252 = vld [vmem:[%s5 + $0x60] sm:$0xff]
  %v253 = vld [vmem:[%s5 + $0x68] sm:$0xff]
  %v254 = vld [vmem:[%s5 + $0x70] sm:$0xff]
  %v255 = vld [vmem:[%s5 + $0x78] sm:$0xff]
  %v256 = vld [vmem:[%s5 + $0x80] sm:$0xff]
  %v257 = vld [vmem:[%s5 + $0x88] sm:$0xff]
  %v258 = vld [vmem:[%s5 + $0x90] sm:$0xff]
  %v259 = vld [vmem:[%s5 + $0x98] sm:$0xff]
  %v260 = vld [vmem:[%s5 + $0xa0] sm:$0xff]
  %v261 = vld [vmem:[%s5 + $0xa8] sm:$0xff]
  %v262 = vld [vmem:[%s5 + $0xb0] sm:$0xff]
  %v263 = vld [vmem:[%s5 + $0xb8] sm:$0xff]
  %v264 = vld [vmem:[%s5 + $0xc0] sm:$0xff]
  %v265 = vld [vmem:[%s5 + $0xc8] sm:$0xff]
  %v266 = vld [vmem:[%s5 + $0xd0] sm:$0xff]
  %v267 = vld [vmem:[%s5 + $0xd8] sm:$0xff]
  %v268 = vld [vmem:[%s5 + $0xe0] sm:$0xff]
  %v269 = vld [vmem:[%s5 + $0xe8] sm:$0xff]
  %v270 = vld [vmem:[%s5 + $0xf0] sm:$0xff]
  %v271 = vld [vmem:[%s5 + $0xf8] sm:$0xff]
  %v272 = vld [vmem:[%s5 + $0x100] sm:$0xff]
  %v273 = vld [vmem:[%s5 + $0x108] sm:$0xff]
  %v274 = vld [vmem:[%s5 + $0x110] sm:$0xff]
  %v275 = vld [vmem:[%s5 + $0x118] sm:$0xff]
  %v276 = vld [vmem:[%s5 + $0x120] sm:$0xff]
  %v277 = vld [vmem:[%s5 + $0x128] sm:$0xff]
  %v278 = vld [vmem:[%s5 + $0x130] sm:$0xff]
  %v279 = vld [vmem:[%s5 + $0x138] sm:$0xff]
  %v280 = vld [vmem:[%s5 + $0x140] sm:$0xff]
  %v281 = vld [vmem:[%s5 + $0x148] sm:$0xff]
  %v282 = vld [vmem:[%s5 + $0x150] sm:$0xff]
  %v283 = vld [vmem:[%s5 + $0x158] sm:$0xff]
  %v284 = vld [vmem:[%s5 + $0x160] sm:$0xff]
  %v285 = vld [vmem:[%s5 + $0x168] sm:$0xff]
  %v286 = vld [vmem:[%s5 + $0x170] sm:$0xff]
  %v287 = vld [vmem:[%s5 + $0x178] sm:$0xff]
  %v288 = vld [vmem:[%s6] sm:$0x3]
  %v290 = vlaneseq
  %v291 = vshrl.u32 %v290, 7
  %v292 = vsub.s32 0, %v291
  %v293 = vrot.slane %v288, %v292
  %v294 = vlaneseq
  %v295 = vshrl.u32 %v294, 7
  %v296 = vsub.s32 1, %v295
  %v297 = vrot.slane %v288, %v296
  %v300 = vsel %vm160, %v237, 0
  %302 = vmatprep.subr.mxu0 %v241
  %303 = vmatpush1.msra.mxu0 %v240
  %304 = vmatprep.subr.mxu0 %v243
  %305 = vmatpush1.msra.mxu0 %v242
  %306 = vmatprep.subr.mxu0 %v245
  %307 = vmatpush1.msra.mxu0 %v244
  %308 = vmatprep.subr.mxu0 %v247
  %309 = vmatpush1.msra.mxu0 %v246
  %310 = vmatprep.subr.mxu0 %v249
  %311 = vmatpush1.msra.mxu0 %v248
  %312 = vmatprep.subr.mxu0 %v251
  %313 = vmatpush1.msra.mxu0 %v250
  %314 = vmatprep.subr.mxu0 %v253
  %315 = vmatpush1.msra.mxu0 %v252
  %316 = vmatprep.subr.mxu0 %v255
  %317 = vmatpush1.msra.mxu0 %v254
  %318 = vmatprep.subr.mxu0 %v257
  %319 = vmatpush1.msra.mxu0 %v256
  %320 = vmatprep.subr.mxu0 %v259
  %321 = vmatpush1.msra.mxu0 %v258
  %322 = vmatprep.subr.mxu0 %v261
  %323 = vmatpush1.msra.mxu0 %v260
  %324 = vmatprep.subr.mxu0 %v263
  %325 = vmatpush1.msra.mxu0 %v262
  %326 = vmatprep.subr.mxu0 %v265
  %327 = vmatpush1.msra.mxu0 %v264
  %328 = vmatprep.subr.mxu0 %v267
  %329 = vmatpush1.msra.mxu0 %v266
  %330 = vmatprep.subr.mxu0 %v269
  %331 = vmatpush1.msra.mxu0 %v268
  %332 = vmatprep.subr.mxu0 %v271
  %333 = vmatpush1.msra.mxu0 %v270
  %334 = vmatprep.subr.mxu0 %v273
  %335 = vmatpush1.msra.mxu0 %v272
  %336 = vmatprep.subr.mxu0 %v275
  %337 = vmatpush1.msra.mxu0 %v274
  %338 = vmatprep.subr.mxu0 %v277
  %339 = vmatpush1.msra.mxu0 %v276
  %340 = vmatprep.subr.mxu0 %v279
  %341 = vmatpush1.msra.mxu0 %v278
  %342 = vmatprep.subr.mxu0 %v281
  %343 = vmatpush1.msra.mxu0 %v280
  %344 = vmatprep.subr.mxu0 %v283
  %345 = vmatpush1.msra.mxu0 %v282
  %346 = vmatprep.subr.mxu0 %v285
  %347 = vmatpush1.msra.mxu0 %v284
  %348 = vmatprep.subr.mxu0 %v287
  %349 = vmatpush1.msra.mxu0 %v286
  %350 = vmatprep.subr.mxu0 0.0
  %351 = vmatpush1.msra.mxu0 0.0
  %352 = vmatprep.subr.mxu0 0.0
  %353 = vmatpush1.msra.mxu0 0.0
  %354 = vmatprep.subr.mxu0 0.0
  %355 = vmatpush1.msra.mxu0 0.0
  %356 = vmatprep.subr.mxu0 0.0
  %357 = vmatpush1.msra.mxu0 0.0
  %358 = vmatprep.subr.mxu0 0.0
  %359 = vmatpush1.msra.mxu0 0.0
  %360 = vmatprep.subr.mxu0 0.0
  %361 = vmatpush1.msra.mxu0 0.0
  %362 = vmatprep.subr.mxu0 0.0
  %363 = vmatpush1.msra.mxu0 0.0
  %364 = vmatprep.subr.mxu0 0.0
  %365 = vmatpush1.msra.mxu0 0.0
  %366 = vmatprep.mubr.f32.mxu0 %v300
  %367 = vmatmul.mubr.f32.gmra.mrb[0].mxu0 %v239
  %v368 = vpop.f32.mrb[0].mxu0
  %v369 = vadd.f32 %v293, %v368
  %v370 = vpop.f32.mrb[0].mxu0
  %v371 = vadd.f32 %v297, %v370
  %372 = vdwg.mxu0
  %v373 = vmax.f32 %v369, 0.0
  %v374 = vmax.f32 %v371, 0.0
  %v375 = vld [vmem:[%s7] sm:$0xff]
  %v376 = vld [vmem:[%s7 + $0x8] sm:$0xff]
  %v377 = vld [vmem:[%s7 + $0x10] sm:$0xff]
  %v378 = vld [vmem:[%s7 + $0x18] sm:$0xff]
  %v379 = vld [vmem:[%s7 + $0x20] sm:$0xff]
  %v380 = vld [vmem:[%s7 + $0x28] sm:$0xff]
  %v381 = vld [vmem:[%s7 + $0x30] sm:$0xff]
  %v382 = vld [vmem:[%s7 + $0x38] sm:$0xff]
  %v383 = vld [vmem:[%s7 + $0x40] sm:$0xff]
  %v384 = vld [vmem:[%s7 + $0x48] sm:$0xff]
  %v385 = vld [vmem:[%s7 + $0x50] sm:$0xff]
  %v386 = vld [vmem:[%s7 + $0x58] sm:$0xff]
  %v387 = vld [vmem:[%s7 + $0x60] sm:$0xff]
  %v388 = vld [vmem:[%s7 + $0x68] sm:$0xff]
  %v389 = vld [vmem:[%s7 + $0x70] sm:$0xff]
  %v390 = vld [vmem:[%s7 + $0x78] sm:$0xff]
  %v391 = vld [vmem:[%s7 + $0x80] sm:$0xff]
  %v392 = vld [vmem:[%s7 + $0x88] sm:$0xff]
  %v393 = vld [vmem:[%s7 + $0x90] sm:$0xff]
  %v394 = vld [vmem:[%s7 + $0x98] sm:$0xff]
  %v395 = vld [vmem:[%s7 + $0xa0] sm:$0xff]
  %v396 = vld [vmem:[%s7 + $0xa8] sm:$0xff]
  %v397 = vld [vmem:[%s7 + $0xb0] sm:$0xff]
  %v398 = vld [vmem:[%s7 + $0xb8] sm:$0xff]
  %v399 = vld [vmem:[%s7 + $0xc0] sm:$0xff]
  %v400 = vld [vmem:[%s7 + $0xc8] sm:$0xff]
  %v401 = vld [vmem:[%s7 + $0xd0] sm:$0xff]
  %v402 = vld [vmem:[%s7 + $0xd8] sm:$0xff]
  %v403 = vld [vmem:[%s7 + $0xe0] sm:$0xff]
  %v404 = vld [vmem:[%s7 + $0xe8] sm:$0xff]
  %v405 = vld [vmem:[%s7 + $0xf0] sm:$0xff]
  %v406 = vld [vmem:[%s7 + $0xf8] sm:$0xff]
  %v407 = vld [vmem:[%s7 + $0x100] sm:$0xff]
  %v408 = vld [vmem:[%s7 + $0x108] sm:$0xff]
  %v409 = vld [vmem:[%s7 + $0x110] sm:$0xff]
  %v410 = vld [vmem:[%s7 + $0x118] sm:$0xff]
  %v411 = vld [vmem:[%s7 + $0x120] sm:$0xff]
  %v412 = vld [vmem:[%s7 + $0x128] sm:$0xff]
  %v413 = vld [vmem:[%s7 + $0x130] sm:$0xff]
  %v414 = vld [vmem:[%s7 + $0x138] sm:$0xff]
  %v415 = vld [vmem:[%s8] sm:$0x3]
  %v417 = vlaneseq
  %v418 = vshrl.u32 %v417, 7
  %v419 = vsub.s32 0, %v418
  %v420 = vrot.slane %v415, %v419
  %v421 = vlaneseq
  %v422 = vshrl.u32 %v421, 7
  %v423 = vsub.s32 1, %v422
  %v424 = vrot.slane %v415, %v423
  %v428 = vsel %vm143, %v374, 0
  %430 = vmatprep.subr.mxu0 %v376
  %431 = vmatpush1.msra.mxu0 %v375
  %432 = vmatprep.subr.mxu0 %v378
  %433 = vmatpush1.msra.mxu0 %v377
  %434 = vmatprep.subr.mxu0 %v380
  %435 = vmatpush1.msra.mxu0 %v379
  %436 = vmatprep.subr.mxu0 %v382
  %437 = vmatpush1.msra.mxu0 %v381
  %438 = vmatprep.subr.mxu0 %v384
  %439 = vmatpush1.msra.mxu0 %v383
  %440 = vmatprep.subr.mxu0 %v386
  %441 = vmatpush1.msra.mxu0 %v385
  %442 = vmatprep.subr.mxu0 %v388
  %443 = vmatpush1.msra.mxu0 %v387
  %444 = vmatprep.subr.mxu0 %v390
  %445 = vmatpush1.msra.mxu0 %v389
  %446 = vmatprep.subr.mxu0 %v392
  %447 = vmatpush1.msra.mxu0 %v391
  %448 = vmatprep.subr.mxu0 %v394
  %449 = vmatpush1.msra.mxu0 %v393
  %450 = vmatprep.subr.mxu0 %v396
  %451 = vmatpush1.msra.mxu0 %v395
  %452 = vmatprep.subr.mxu0 %v398
  %453 = vmatpush1.msra.mxu0 %v397
  %454 = vmatprep.subr.mxu0 %v400
  %455 = vmatpush1.msra.mxu0 %v399
  %456 = vmatprep.subr.mxu0 %v402
  %457 = vmatpush1.msra.mxu0 %v401
  %458 = vmatprep.subr.mxu0 %v404
  %459 = vmatpush1.msra.mxu0 %v403
  %460 = vmatprep.subr.mxu0 %v406
  %461 = vmatpush1.msra.mxu0 %v405
  %462 = vmatprep.subr.mxu0 %v408
  %463 = vmatpush1.msra.mxu0 %v407
  %464 = vmatprep.subr.mxu0 %v410
  %465 = vmatpush1.msra.mxu0 %v409
  %466 = vmatprep.subr.mxu0 %v412
  %467 = vmatpush1.msra.mxu0 %v411
  %468 = vmatprep.subr.mxu0 %v414
  %469 = vmatpush1.msra.mxu0 %v413
  %470 = vmatprep.subr.mxu0 0.0
  %471 = vmatpush1.msra.mxu0 0.0
  %472 = vmatprep.subr.mxu0 0.0
  %473 = vmatpush1.msra.mxu0 0.0
  %474 = vmatprep.subr.mxu0 0.0
  %475 = vmatpush1.msra.mxu0 0.0
  %476 = vmatprep.subr.mxu0 0.0
  %477 = vmatpush1.msra.mxu0 0.0
  %478 = vmatprep.subr.mxu0 0.0
  %479 = vmatpush1.msra.mxu0 0.0
  %480 = vmatprep.subr.mxu0 0.0
  %481 = vmatpush1.msra.mxu0 0.0
  %482 = vmatprep.subr.mxu0 0.0
  %483 = vmatpush1.msra.mxu0 0.0
  %484 = vmatprep.subr.mxu0 0.0
  %485 = vmatpush1.msra.mxu0 0.0
  %486 = vmatprep.subr.mxu0 0.0
  %487 = vmatpush1.msra.mxu0 0.0
  %488 = vmatprep.subr.mxu0 0.0
  %489 = vmatpush1.msra.mxu0 0.0
  %490 = vmatprep.subr.mxu0 0.0
  %491 = vmatpush1.msra.mxu0 0.0
  %492 = vmatprep.subr.mxu0 0.0
  %493 = vmatpush1.msra.mxu0 0.0
  %494 = vmatprep.mubr.f32.mxu0 %v428
  %495 = vmatmul.mubr.f32.gmra.mrb[0].mxu0 %v373
  %v496 = vpop.f32.mrb[0].mxu0
  %v497 = vadd.f32 %v420, %v496
  %v498 = vpop.f32.mrb[0].mxu0
  %v499 = vadd.f32 %v424, %v498
  %500 = vdwg.mxu0
  %v501 = vmax.f32 %v497, 0.0
  %v502 = vmax.f32 %v499, 0.0
  %v503 = vld [vmem:[%s9] sm:$0xff]
  %v504 = vld [vmem:[%s9 + $0x8] sm:$0xff]
  %v505 = vld [vmem:[%s9 + $0x10] sm:$0xff]
  %v506 = vld [vmem:[%s9 + $0x18] sm:$0xff]
  %v507 = vld [vmem:[%s9 + $0x20] sm:$0xff]
  %v508 = vld [vmem:[%s9 + $0x28] sm:$0xff]
  %v509 = vld [vmem:[%s9 + $0x30] sm:$0xff]
  %v510 = vld [vmem:[%s9 + $0x38] sm:$0xff]
  %v511 = vld [vmem:[%s9 + $0x40] sm:$0xff]
  %v512 = vld [vmem:[%s9 + $0x48] sm:$0xff]
  %v513 = vld [vmem:[%s9 + $0x50] sm:$0xff]
  %v514 = vld [vmem:[%s9 + $0x58] sm:$0xff]
  %v515 = vld [vmem:[%s9 + $0x60] sm:$0xff]
  %v516 = vld [vmem:[%s9 + $0x68] sm:$0xff]
  %v517 = vld [vmem:[%s9 + $0x70] sm:$0xff]
  %v518 = vld [vmem:[%s9 + $0x78] sm:$0xff]
  %v519 = vld [vmem:[%s9 + $0x80] sm:$0xff]
  %v520 = vld [vmem:[%s9 + $0x88] sm:$0xff]
  %v521 = vld [vmem:[%s9 + $0x90] sm:$0xff]
  %v522 = vld [vmem:[%s9 + $0x98] sm:$0xff]
  %v523 = vld [vmem:[%s9 + $0xa0] sm:$0xff]
  %v524 = vld [vmem:[%s9 + $0xa8] sm:$0xff]
  %v525 = vld [vmem:[%s9 + $0xb0] sm:$0xff]
  %v526 = vld [vmem:[%s9 + $0xb8] sm:$0xff]
  %v527 = vld [vmem:[%s9 + $0xc0] sm:$0xff]
  %v528 = vld [vmem:[%s9 + $0xc8] sm:$0xff]
  %v529 = vld [vmem:[%s9 + $0xd0] sm:$0xff]
  %v530 = vld [vmem:[%s9 + $0xd8] sm:$0xff]
  %v531 = vld [vmem:[%s9 + $0xe0] sm:$0xff]
  %v532 = vld [vmem:[%s9 + $0xe8] sm:$0xff]
  %v533 = vld [vmem:[%s9 + $0xf0] sm:$0xff]
  %v534 = vld [vmem:[%s9 + $0xf8] sm:$0xff]
  %v535 = vld [vmem:[%s9 + $0x100] sm:$0xff]
  %v536 = vld [vmem:[%s9 + $0x108] sm:$0xff]
  %v537 = vld [vmem:[%s9 + $0x110] sm:$0xff]
  %v538 = vld [vmem:[%s9 + $0x118] sm:$0xff]
  %v539 = vld [vmem:[%s9 + $0x120] sm:$0xff]
  %v540 = vld [vmem:[%s9 + $0x128] sm:$0xff]
  %v541 = vld [vmem:[%s9 + $0x130] sm:$0xff]
  %v542 = vld [vmem:[%s9 + $0x138] sm:$0xff]
  %v543 = vld [vmem:[%s10] sm:$0x3]
  %v545 = vlaneseq
  %v546 = vshrl.u32 %v545, 7
  %v547 = vsub.s32 0, %v546
  %v548 = vrot.slane %v543, %v547
  %v549 = vlaneseq
  %v550 = vshrl.u32 %v549, 7
  %v551 = vsub.s32 1, %v550
  %v552 = vrot.slane %v543, %v551
  %v556 = vsel %vm143, %v502, 0
  %558 = vmatprep.subr.mxu0 %v504
  %559 = vmatpush1.msra.mxu0 %v503
  %560 = vmatprep.subr.mxu0 %v506
  %561 = vmatpush1.msra.mxu0 %v505
  %562 = vmatprep.subr.mxu0 %v508
  %563 = vmatpush1.msra.mxu0 %v507
  %564 = vmatprep.subr.mxu0 %v510
  %565 = vmatpush1.msra.mxu0 %v509
  %566 = vmatprep.subr.mxu0 %v512
  %567 = vmatpush1.msra.mxu0 %v511
  %568 = vmatprep.subr.mxu0 %v514
  %569 = vmatpush1.msra.mxu0 %v513
  %570 = vmatprep.subr.mxu0 %v516
  %571 = vmatpush1.msra.mxu0 %v515
  %572 = vmatprep.subr.mxu0 %v518
  %573 = vmatpush1.msra.mxu0 %v517
  %574 = vmatprep.subr.mxu0 %v520
  %575 = vmatpush1.msra.mxu0 %v519
  %576 = vmatprep.subr.mxu0 %v522
  %577 = vmatpush1.msra.mxu0 %v521
  %578 = vmatprep.subr.mxu0 %v524
  %579 = vmatpush1.msra.mxu0 %v523
  %580 = vmatprep.subr.mxu0 %v526
  %581 = vmatpush1.msra.mxu0 %v525
  %582 = vmatprep.subr.mxu0 %v528
  %583 = vmatpush1.msra.mxu0 %v527
  %584 = vmatprep.subr.mxu0 %v530
  %585 = vmatpush1.msra.mxu0 %v529
  %586 = vmatprep.subr.mxu0 %v532
  %587 = vmatpush1.msra.mxu0 %v531
  %588 = vmatprep.subr.mxu0 %v534
  %589 = vmatpush1.msra.mxu0 %v533
  %590 = vmatprep.subr.mxu0 %v536
  %591 = vmatpush1.msra.mxu0 %v535
  %592 = vmatprep.subr.mxu0 %v538
  %593 = vmatpush1.msra.mxu0 %v537
  %594 = vmatprep.subr.mxu0 %v540
  %595 = vmatpush1.msra.mxu0 %v539
  %596 = vmatprep.subr.mxu0 %v542
  %597 = vmatpush1.msra.mxu0 %v541
  %598 = vmatprep.subr.mxu0 0.0
  %599 = vmatpush1.msra.mxu0 0.0
  %600 = vmatprep.subr.mxu0 0.0
  %601 = vmatpush1.msra.mxu0 0.0
  %602 = vmatprep.subr.mxu0 0.0
  %603 = vmatpush1.msra.mxu0 0.0
  %604 = vmatprep.subr.mxu0 0.0
  %605 = vmatpush1.msra.mxu0 0.0
  %606 = vmatprep.subr.mxu0 0.0
  %607 = vmatpush1.msra.mxu0 0.0
  %608 = vmatprep.subr.mxu0 0.0
  %609 = vmatpush1.msra.mxu0 0.0
  %610 = vmatprep.subr.mxu0 0.0
  %611 = vmatpush1.msra.mxu0 0.0
  %612 = vmatprep.subr.mxu0 0.0
  %613 = vmatpush1.msra.mxu0 0.0
  %614 = vmatprep.subr.mxu0 0.0
  %615 = vmatpush1.msra.mxu0 0.0
  %616 = vmatprep.subr.mxu0 0.0
  %617 = vmatpush1.msra.mxu0 0.0
  %618 = vmatprep.subr.mxu0 0.0
  %619 = vmatpush1.msra.mxu0 0.0
  %620 = vmatprep.subr.mxu0 0.0
  %621 = vmatpush1.msra.mxu0 0.0
  %622 = vmatprep.mubr.f32.mxu0 %v556
  %623 = vmatmul.mubr.f32.gmra.mrb[0].mxu0 %v501
  %v624 = vpop.f32.mrb[0].mxu0
  %v625 = vadd.f32 %v548, %v624
  %v626 = vpop.f32.mrb[0].mxu0
  %v627 = vadd.f32 %v552, %v626
  %628 = vdwg.mxu0
  %v629 = vmax.f32 %v625, 0.0
  %v630 = vmax.f32 %v627, 0.0
  %v631 = vld [vmem:[%s11] sm:$0xff]
  %v632 = vld [vmem:[%s11 + $0x8] sm:$0xff]
  %v633 = vld [vmem:[%s11 + $0x10] sm:$0xff]
  %v634 = vld [vmem:[%s11 + $0x18] sm:$0xff]
  %v635 = vld [vmem:[%s11 + $0x20] sm:$0xff]
  %v636 = vld [vmem:[%s11 + $0x28] sm:$0xff]
  %v637 = vld [vmem:[%s11 + $0x30] sm:$0xff]
  %v638 = vld [vmem:[%s11 + $0x38] sm:$0xff]
  %v639 = vld [vmem:[%s11 + $0x40] sm:$0xff]
  %v640 = vld [vmem:[%s11 + $0x48] sm:$0xff]
  %v641 = vld [vmem:[%s11 + $0x50] sm:$0xff]
  %v642 = vld [vmem:[%s11 + $0x58] sm:$0xff]
  %v643 = vld [vmem:[%s11 + $0x60] sm:$0xff]
  %v644 = vld [vmem:[%s11 + $0x68] sm:$0xff]
  %v645 = vld [vmem:[%s11 + $0x70] sm:$0xff]
  %v646 = vld [vmem:[%s11 + $0x78] sm:$0xff]
  %v647 = vld [vmem:[%s11 + $0x80] sm:$0xff]
  %v648 = vld [vmem:[%s11 + $0x88] sm:$0xff]
  %v649 = vld [vmem:[%s11 + $0x90] sm:$0xff]
  %v650 = vld [vmem:[%s11 + $0x98] sm:$0xff]
  %v651 = vld [vmem:[%s12] sm:$0x1]
  %v653 = vlaneseq
  %v654 = vshrl.u32 %v653, 7
  %v655 = vsub.s32 0, %v654
  %v656 = vrot.slane %v651, %v655
  %v659 = vsel %vm143, %v630, 0
  %661 = vmatprep.subr.mxu0 0.0
  %662 = vmatpush1.msra.mxu0 %v631
  %663 = vmatprep.subr.mxu0 0.0
  %664 = vmatpush1.msra.mxu0 %v632
  %665 = vmatprep.subr.mxu0 0.0
  %666 = vmatpush1.msra.mxu0 %v633
  %667 = vmatprep.subr.mxu0 0.0
  %668 = vmatpush1.msra.mxu0 %v634
  %669 = vmatprep.subr.mxu0 0.0
  %670 = vmatpush1.msra.mxu0 %v635
  %671 = vmatprep.subr.mxu0 0.0
  %672 = vmatpush1.msra.mxu0 %v636
  %673 = vmatprep.subr.mxu0 0.0
  %674 = vmatpush1.msra.mxu0 %v637
  %675 = vmatprep.subr.mxu0 0.0
  %676 = vmatpush1.msra.mxu0 %v638
  %677 = vmatprep.subr.mxu0 0.0
  %678 = vmatpush1.msra.mxu0 %v639
  %679 = vmatprep.subr.mxu0 0.0
  %680 = vmatpush1.msra.mxu0 %v640
  %681 = vmatprep.subr.mxu0 0.0
  %682 = vmatpush1.msra.mxu0 %v641
  %683 = vmatprep.subr.mxu0 0.0
  %684 = vmatpush1.msra.mxu0 %v642
  %685 = vmatprep.subr.mxu0 0.0
  %686 = vmatpush1.msra.mxu0 %v643
  %687 = vmatprep.subr.mxu0 0.0
  %688 = vmatpush1.msra.mxu0 %v644
  %689 = vmatprep.subr.mxu0 0.0
  %690 = vmatpush1.msra.mxu0 %v645
  %691 = vmatprep.subr.mxu0 0.0
  %692 = vmatpush1.msra.mxu0 %v646
  %693 = vmatprep.subr.mxu0 0.0
  %694 = vmatpush1.msra.mxu0 %v647
  %695 = vmatprep.subr.mxu0 0.0
  %696 = vmatpush1.msra.mxu0 %v648
  %697 = vmatprep.subr.mxu0 0.0
  %698 = vmatpush1.msra.mxu0 %v649
  %699 = vmatprep.subr.mxu0 0.0
  %700 = vmatpush1.msra.mxu0 %v650
  %701 = vmatprep.subr.mxu0 0.0
  %702 = vmatpush1.msra.mxu0 0.0
  %703 = vmatprep.subr.mxu0 0.0
  %704 = vmatpush1.msra.mxu0 0.0
  %705 = vmatprep.subr.mxu0 0.0
  %706 = vmatpush1.msra.mxu0 0.0
  %707 = vmatprep.subr.mxu0 0.0
  %708 = vmatpush1.msra.mxu0 0.0
  %709 = vmatprep.subr.mxu0 0.0
  %710 = vmatpush1.msra.mxu0 0.0
  %711 = vmatprep.subr.mxu0 0.0
  %712 = vmatpush1.msra.mxu0 0.0
  %713 = vmatprep.subr.mxu0 0.0
  %714 = vmatpush1.msra.mxu0 0.0
  %715 = vmatprep.subr.mxu0 0.0
  %716 = vmatpush1.msra.mxu0 0.0
  %717 = vmatprep.subr.mxu0 0.0
  %718 = vmatpush1.msra.mxu0 0.0
  %719 = vmatprep.subr.mxu0 0.0
  %720 = vmatpush1.msra.mxu0 0.0
  %721 = vmatprep.subr.mxu0 0.0
  %722 = vmatpush1.msra.mxu0 0.0
  %723 = vmatprep.subr.mxu0 0.0
  %724 = vmatpush1.msra.mxu0 0.0
  %725 = vmatprep.mubr.f32.mxu0 %v659
  %726 = vmatmul.mubr.f32.gmra.mrb[0].mxu0 %v629
  %v727 = vpop.f32.mrb[0].mxu0
  %v728 = vadd.f32 %v656, %v727
  %v729 = vpop.f32.mrb[0].mxu0
  %730 = vdwg.mxu0
  %v731 = vlaneseq
  %v732 = vand.u32 %v731, 127
  %vm733 = vcmp.lt.s32.totalorder %v732, 2
  %vm734 = vcmp.ge.s32.totalorder %v732, 6
  %vm735 = vmor %vm733, %vm734
  %vm736 = vcmp.ge.s32.totalorder %v732, 4
  %vm737 = vcmp.lt.s32.totalorder %v732, 6
  %vm738 = vmand %vm736, %vm737
  %v739 = vxor.u32 %v728, 2147483648
  %v740 = vmul.f32 %v739, 1.442695
  %v741 = vpow.pop %v740
  %v742 = vadd.f32 %v741, 1.0
  %v743 = vrcp.pop %v742
  %v744 = vmul.f32 1.0, %v743
  %v745 = vmul.f32 %v728, 0.5
  %v746 = vsel %vm738, %v745, %v728
  %v747 = vsel %vm735, %v744, %v746
  %vm748 = vcmask 64512
  %749 = vst.msk [vmem:[%s13] sm:$0xff] %vm748, %v747
  // Predicated region
  $region54: #{pem_forward.3} parent=0 // pred_check
    _
  $region55: #{pem_forward.3} parent=0 // pred_check_branch
    %751 = sbr.rel (0) target = $region57
  $region56: #{pem_forward.3} parent=0 // pred_region
    _
  $region57: #{pem_forward.3} parent=0 // pred_fallthru
    _
  // Predicated region
  $region58: #{pem_forward.3} parent=0 // pred_check
    _
  $region59: #{pem_forward.3} parent=0 // pred_check_branch
    %753 = sbr.rel (0) target = $region61
  $region60: #{pem_forward.3} parent=0 // pred_region
    _
  $region61: #{pem_forward.3} parent=0 // pred_fallthru
    _

</llo_original>
